<compile_context>
chip_gen: v6e
topology: v6e:2x2x1
jax: 0.10.0
libtpu: 0.0.40
codegen_flags: <defaults>
</compile_context>

<pallas_src>
import functools
import math

import jax
import jax.numpy as jnp
from jax.experimental import pallas as pl
from jax.experimental.pallas import tpu as pltpu


def _cdiv(a, b):
    return -(-a // b)


def _weighted_sum_kernel(n_features, w_ref, *refs):
    """refs = (f_0, ..., f_{n-1}, out); each feature/out block is (TR, W)."""
    f_refs = refs[:n_features]
    o_ref = refs[n_features]
    acc = w_ref[0] * f_refs[0][...].astype(jnp.float32)
    for i in range(1, n_features):
        acc = acc + w_ref[i] * f_refs[i][...].astype(jnp.float32)
    o_ref[...] = acc.astype(o_ref.dtype)


def _vmem_budget_and_limit():
    """Chip-aware scoped-VMEM limit and pipeline-buffer budget (bytes)."""
    cap = None
    try:
        info = pltpu.get_tpu_info()
        cap = getattr(info, "vmem_capacity_bytes", None)
    except Exception:
        cap = None
    if not cap:
        cap = 64 * 1024 * 1024  # conservative fallback (v7x per-core VMEM)
    # v7x (64 MiB): limit 48 MiB / budget 36 MiB.
    # v5e/v6e (128 MiB): limit 64 MiB / budget 48 MiB.
    limit = min(int(cap * 3 // 4), 64 * 1024 * 1024)
    budget = int(limit * 3 // 4)
    return budget, limit


def _choose_width(total):
    """Largest lane-dense width that divides `total`; else fall back to padding."""
    for w in (512, 256, 128):
        if total % w == 0:
            return w, False
    return 512, True


def _choose_tile_rows(rows, n_features, width, itemsize, budget):
    # Sublane packing granularity for the dtype.
    sub = {4: 8, 2: 16, 1: 32}.get(itemsize, 8)
    # Double-buffered pipeline: 2 copies of (N inputs + 1 output) blocks.
    per_row = 2 * (n_features + 1) * width * itemsize
    tr = budget // per_row
    tr = min(tr, 1024)                       # plenty to amortize ~0.35 us/step
    rows_sub = _cdiv(rows, sub) * sub
    tr = min(tr, rows_sub)                   # don't over-pad tiny inputs
    tr = max((tr // sub) * sub, sub)         # packed-sublane multiple
    # Balance the 1-D grid across TensorCores (v7x has 2 per chip): prefer
    # >= 2 (ideally 4) roughly-equal tiles while keeping tiles >= 512 rows,
    # which stays at ~85% of the HBM roofline per step.
    if rows_sub >= 2 * 512:
        max_balanced = rows_sub // 512
        target = min(4, max_balanced)
        tr_bal = _cdiv(_cdiv(rows_sub, target), sub) * sub
        tr = min(tr, tr_bal)
    return tr


def scale_interaction(features, scale_weights):
    """features: list/tuple of same-shape arrays.  Returns softmax-weighted sum."""
    features = list(features)
    n = len(features)
    assert n >= 1 and scale_weights.shape == (n,)
    orig_shape = features[0].shape
    dtype = features[0].dtype
    for f in features:
        assert f.shape == orig_shape, "all features must share a shape"

    # Tiny N-element softmax as a plain XLA op; kernel only sees normalized
    # weights (resident in SMEM).
    weights = jax.nn.softmax(scale_weights.astype(jnp.float32))

    total = math.prod(orig_shape) if orig_shape else 1
    itemsize = jnp.dtype(dtype).itemsize

    w, needs_pad = _choose_width(total)
    rows = _cdiv(total, w)
    budget, vmem_limit = _vmem_budget_and_limit()
    tr = _choose_tile_rows(rows, n, w, itemsize, budget)
    grid = _cdiv(rows, tr)

    if grid <= 1:
        # Tiny-input fast path: a single tile.  A plain XLA fusion is strictly
        # faster than the pallas_call launch + pipeline prologue here.
        acc = weights[0] * features[0].astype(jnp.float32)
        for i in range(1, n):
            acc = acc + weights[i] * features[i].astype(jnp.float32)
        return acc.astype(dtype)

    padded_total = rows * w

    def to_slab(f):
        flat = f.reshape(-1)
        if needs_pad:
            # Only hit when total is not a multiple of 128 (rare); pads to a
            # whole number of lanes, never to a whole number of tiles.
            flat = jnp.pad(flat, (0, padded_total - total))
        return flat.reshape(rows, w)

    slabs = [to_slab(f) for f in features]

    feat_spec = pl.BlockSpec((tr, w), lambda i: (i, 0))
    out = pl.pallas_call(
        functools.partial(_weighted_sum_kernel, n),
        out_shape=jax.ShapeDtypeStruct((rows, w), dtype),
        grid_spec=pltpu.PrefetchScalarGridSpec(
            num_scalar_prefetch=0,
            grid=(grid,),
            in_specs=[pl.BlockSpec(memory_space=pltpu.MemorySpace.SMEM)]
                     + [feat_spec] * n,
            out_specs=feat_spec,
        ),
        compiler_params=pltpu.CompilerParams(
            dimension_semantics=("parallel",),
            vmem_limit_bytes=vmem_limit,
        ),
    )(weights, *slabs)

    flat_out = out.reshape(-1)
    if needs_pad:
        flat_out = flat_out[:total]
    return flat_out.reshape(orig_shape)


def _reference(features, scale_weights):
    wts = jax.nn.softmax(scale_weights.astype(jnp.float32))
    acc = wts[0] * features[0].astype(jnp.float32)
    for i in range(1, len(features)):
        acc = acc + wts[i] * features[i].astype(jnp.float32)
    return acc.astype(features[0].dtype)


def _run_case(key, shape, n_scales, dtype, atol):
    keys = jax.random.split(key, n_scales + 1)
    features = [
        jax.random.normal(keys[i], shape, dtype=jnp.float32).astype(dtype)
        for i in range(n_scales)
    ]
    scale_weights = jax.random.normal(keys[n_scales], (n_scales,), dtype=jnp.float32)

    out = scale_interaction(features, scale_weights)
    out = jax.block_until_ready(out)
    ref = _reference(features, scale_weights)

    assert out.shape == shape and out.dtype == dtype
    diff = jnp.max(jnp.abs(out.astype(jnp.float32) - ref.astype(jnp.float32)))
    assert jnp.allclose(out.astype(jnp.float32), ref.astype(jnp.float32),
                        atol=atol, rtol=1e-5), float(diff)


if __name__ == "__main__":
    key = jax.random.PRNGKey(0)
    k1, k2, k3, k4 = jax.random.split(key, 4)

    # 1) Small module-scale case (batch=2, channels=4, 16x16): single-tile
    #    fast path (XLA fusion).
    _run_case(k1, (2, 4, 16, 16), n_scales=3, dtype=jnp.float32, atol=1e-6)

    # 2) Pallas path, evenly divided grid (f32, grid of 2 balanced tiles).
    _run_case(k2, (4, 8, 128, 128), n_scales=3, dtype=jnp.float32, atol=1e-6)

    # 3) Pallas path, ragged last row-tile (masked final tile, no padding).
    _run_case(k3, (13, 100, 512), n_scales=4, dtype=jnp.float32, atol=1e-6)

    # 4) Pallas path, bf16 (tile rows rounded to 16-row sublane packing).
    _run_case(k4, (4, 8, 128, 128), n_scales=3, dtype=jnp.bfloat16, atol=2e-2)

    print("KERNEL_OK")
</pallas_src>

<mosaic_0001>
module attributes {stable_mosaic.version = 11 : i64} {
  func.func @_weighted_sum_kernel(%arg0: i32, %arg1: memref<3xf32, #tpu.memory_space<smem>>, %arg2: memref<512x512xf32, #tpu.memory_space<vmem>>, %arg3: memref<512x512xf32, #tpu.memory_space<vmem>>, %arg4: memref<512x512xf32, #tpu.memory_space<vmem>>, %arg5: memref<512x512xf32, #tpu.memory_space<vmem>>) attributes {dimension_semantics = [#tpu.dimension_semantics<parallel>], iteration_bounds = array<i64: 2>, scalar_prefetch = 0 : i64, scratch_operands = 0 : i64, tpu.core_type = #tpu.core_type<tc>, window_params = [{transform_indices = @transform_0, window_bounds = array<i64: 3>}, {transform_indices = @transform_1, window_bounds = array<i64: 512, 512>}, {transform_indices = @transform_2, window_bounds = array<i64: 512, 512>}, {transform_indices = @transform_3, window_bounds = array<i64: 512, 512>}, {transform_indices = @transform_4, window_bounds = array<i64: 512, 512>}]} {
    %c0 = arith.constant 0 : index
    %0 = memref.load %arg1[%c0] : memref<3xf32, #tpu.memory_space<smem>>
    %c0_0 = arith.constant 0 : index
    %c0_1 = arith.constant 0 : index
    %1 = vector.load %arg2[%c0_0, %c0_1] : memref<512x512xf32, #tpu.memory_space<vmem>>, vector<512x512xf32>
    %2 = vector.broadcast %0 : f32 to vector<512x512xf32>
    %3 = arith.mulf %2, %1 : vector<512x512xf32>
    %c1 = arith.constant 1 : index
    %4 = memref.load %arg1[%c1] : memref<3xf32, #tpu.memory_space<smem>>
    %c0_2 = arith.constant 0 : index
    %c0_3 = arith.constant 0 : index
    %5 = vector.load %arg3[%c0_2, %c0_3] : memref<512x512xf32, #tpu.memory_space<vmem>>, vector<512x512xf32>
    %6 = vector.broadcast %4 : f32 to vector<512x512xf32>
    %7 = arith.mulf %6, %5 : vector<512x512xf32>
    %8 = arith.addf %3, %7 : vector<512x512xf32>
    %c2 = arith.constant 2 : index
    %9 = memref.load %arg1[%c2] : memref<3xf32, #tpu.memory_space<smem>>
    %c0_4 = arith.constant 0 : index
    %c0_5 = arith.constant 0 : index
    %10 = vector.load %arg4[%c0_4, %c0_5] : memref<512x512xf32, #tpu.memory_space<vmem>>, vector<512x512xf32>
    %11 = vector.broadcast %9 : f32 to vector<512x512xf32>
    %12 = arith.mulf %11, %10 : vector<512x512xf32>
    %13 = arith.addf %8, %12 : vector<512x512xf32>
    %c0_6 = arith.constant 0 : index
    %c0_7 = arith.constant 0 : index
    %14 = vector.load %arg5[%c0_6, %c0_7] : memref<512x512xf32, #tpu.memory_space<vmem>>, vector<512x512xf32>
    tpu.vector_store %arg5[%c0_6, %c0_7], %13 {strides = array<i32>} : memref<512x512xf32, #tpu.memory_space<vmem>>, vector<512x512xf32>,
    return
  }
  func.func @transform_0(%arg0: i32) -> i32 {
    %c0_i32 = arith.constant 0 : i32
    %c0_i32_0 = arith.constant 0 : i32
    return %c0_i32 : i32
  }
  func.func @transform_1(%arg0: i32) -> (i32, i32) {
    %c0_i32 = arith.constant 0 : i32
    %c0_i32_0 = arith.constant 0 : i32
    return %arg0, %c0_i32 : i32, i32
  }
  func.func @transform_2(%arg0: i32) -> (i32, i32) {
    %c0_i32 = arith.constant 0 : i32
    %c0_i32_0 = arith.constant 0 : i32
    return %arg0, %c0_i32 : i32, i32
  }
  func.func @transform_3(%arg0: i32) -> (i32, i32) {
    %c0_i32 = arith.constant 0 : i32
    %c0_i32_0 = arith.constant 0 : i32
    return %arg0, %c0_i32 : i32, i32
  }
  func.func @transform_4(%arg0: i32) -> (i32, i32) {
    %c0_i32 = arith.constant 0 : i32
    %c0_i32_0 = arith.constant 0 : i32
    return %arg0, %c0_i32 : i32, i32
  }
}

</mosaic_0001>

<llo_original>
// kernel: tpu_custom_call.1
$region0: #{tpu_custom_call.1}
  #allocation0 [shape = 'u32[]', space=smem, size = 0x4, offset = 0x4, fixed_abs, tag = 'smem constant byte address 0x4 - core index']
  #allocation1 [shape = 'u32[144,128]{1,0:T(1,128)}', space=vmem, size = 0x12000, scoped, tag = 'internal scratch']
  %s0 = inlined_call_operand.hbm [shape: f32[3], index: 0, kind: input, shape index: {}]
  %s1 = inlined_call_operand.hbm [shape: f32[1024,512], index: 1, kind: input, shape index: {}]
  %s2 = inlined_call_operand.hbm [shape: f32[1024,512], index: 2, kind: input, shape index: {}]
  %s3 = inlined_call_operand.hbm [shape: f32[1024,512], index: 3, kind: input, shape index: {}]
  %s4 = inlined_call_operand.hbm [shape: f32[1024,512], index: 4, kind: output, shape index: {}]
  %s5 = sld [smem:[#allocation0]]
  $region65: #{tpu_custom_call.1} parent=0
    _
  %s7 = ssub.s32 1, %s5
  %s8 = scalar_select 0, %s7, %s5
  $region1: #{tpu_custom_call.1} parent=0
    #allocation2 [shape = 'u8[512]{0}', space=smem, size = 0x200, scoped, tag = 'input window, operand 0, single buffered']
    #allocation3 [shape = 's32[2]{0}', space=sflag, size = 0x8, scoped, tag = 'scoped memory for tpu_custom_call.1']
    #allocation4 [shape = 's32[2]{0}', space=sflag, size = 0x8, scoped, tag = 'scoped memory for tpu_custom_call.1']
    #allocation5 [shape = 's32[2]{0}', space=sflag, size = 0x8, scoped, tag = 'scoped memory for tpu_custom_call.1']
    #allocation6 [shape = 'u8[2097152]{0}', space=vmem, size = 0x200000, scoped, tag = 'input window, operand 1']
    #allocation7 [shape = 'u8[2097152]{0}', space=vmem, size = 0x200000, scoped, tag = 'input window, operand 2']
    #allocation8 [shape = 's32[2]{0}', space=sflag, size = 0x8, scoped, tag = 'scoped memory for tpu_custom_call.1']
    #allocation9 [shape = 'u8[2097152]{0}', space=vmem, size = 0x200000, scoped, tag = 'input window, operand 3']
    #allocation10 [shape = 'u8[2097152]{0}', space=vmem, size = 0x200000, scoped, tag = 'output window, operand 0']
    %9 = vsyncpa [#allocation5], 0
    %10 = vsyncpa [#allocation3], 0
    %s11 = scalar_lea.sflag [#allocation3], 1
    %12 = vsyncpa %s11, 0
    %13 = vsyncpa [#allocation8], 0
    %s14 = scalar_lea.sflag [#allocation8], 1
    %15 = vsyncpa %s14, 0
    %16 = vsyncpa [#allocation4], 0
    %s17 = scalar_lea.sflag [#allocation4], 1
    %18 = vsyncpa %s17, 0
    loop: start=0, step=1, limit=4
    $region2: #{tpu_custom_call.1} parent=1 // loop_pre_header
      _
    $region3: #{tpu_custom_call.1} parent=1 // loop_header
      %s20 = sphi 0, %s24
      %p21 = scmp.ge.s32.totalorder %s20, 4
      %s28 = sphi 0, %s28
      %s30 = sphi 0, %s28
      %s31 = sphi 0, %s30
      %s45 = sphi 0, %s31
      %s51 = sphi 0, %s53
      %s54 = sphi 0, %s51
      %s55 = sphi 0, %s54
      %s71 = sphi 0, %s55
      %s77 = sphi 0, %s79
      %s80 = sphi 0, %s77
      %s81 = sphi 0, %s80
      %s97 = sphi 0, %s81
      %s103 = sphi 0, %s105
      %s106 = sphi 0, %s103
      %s107 = sphi 0, %s106
      %s123 = sphi 0, %s107
      %s129 = sphi 0, %s131
      %s132 = sphi 0, %s129
      %s133 = sphi 0, %s132
      %s149 = sphi 0, %s133
    $region4: #{tpu_custom_call.1} parent=1 // loop_header_branch
      %23 = sbr.rel (%p21) target = $region8
    $region5: #{tpu_custom_call.1} parent=1 // loop_body
      %s25 = ssub.s32 %s20, 1
      %s26 = ssub.s32 %s20, 2
      %s27 = sadd.s32 %s20, 1
      %s29 = sadd.s32 %s28, 1
      %p32 = scmp.eq.s32.totalorder %s20, 1
      %p33 = scmp.ne.s32.totalorder %s28, %s30
      %p34 = scmp.eq.s32.totalorder %s20, 0
      %p35 = por %p33, %p34
      %p36 = scmp.ne.s32.totalorder %s28, %s30
      %p37 = scmp.eq.s32.totalorder %s25, 1
      %p38 = por %p36, %p37
      %p39 = scmp.ne.s32.totalorder %s30, %s31
      %p40 = scmp.eq.s32.totalorder %s25, 0
      %p41 = por %p39, %p40
      %p42 = scmp.ne.s32.totalorder %s30, %s31
      %p43 = scmp.eq.s32.totalorder %s26, 1
      %p44 = por %p42, %p43
      %p46 = scmp.ne.s32.totalorder %s31, %s45
      %p47 = scmp.eq.s32.totalorder %s26, 0
      %p48 = por %p46, %p47
      %s49 = ssub.s32 %s20, %s27
      %p50 = scmp.eq.s32.totalorder %s49, 0
      %s52 = sadd.s32 %s51, 1
      %s53 = scalar_select %p50, %s51, %s52
      %p56 = pneg %p50
      %p57 = scmp.eq.s32.totalorder %s20, 1
      %p58 = por %p56, %p57
      %p59 = scmp.ne.s32.totalorder %s51, %s54
      %p60 = scmp.eq.s32.totalorder %s20, 0
      %p61 = por %p59, %p60
      %p62 = scmp.ne.s32.totalorder %s51, %s54
      %p63 = scmp.eq.s32.totalorder %s25, 1
      %p64 = por %p62, %p63
      %p65 = scmp.ne.s32.totalorder %s54, %s55
      %p66 = scmp.eq.s32.totalorder %s25, 0
      %p67 = por %p65, %p66
      %p68 = scmp.ne.s32.totalorder %s54, %s55
      %p69 = scmp.eq.s32.totalorder %s26, 1
      %p70 = por %p68, %p69
      %p72 = scmp.ne.s32.totalorder %s55, %s71
      %p73 = scmp.eq.s32.totalorder %s26, 0
      %p74 = por %p72, %p73
      %s75 = ssub.s32 %s20, %s27
      %p76 = scmp.eq.s32.totalorder %s75, 0
      %s78 = sadd.s32 %s77, 1
      %s79 = scalar_select %p76, %s77, %s78
      %p82 = pneg %p76
      %p83 = scmp.eq.s32.totalorder %s20, 1
      %p84 = por %p82, %p83
      %p85 = scmp.ne.s32.totalorder %s77, %s80
      %p86 = scmp.eq.s32.totalorder %s20, 0
      %p87 = por %p85, %p86
      %p88 = scmp.ne.s32.totalorder %s77, %s80
      %p89 = scmp.eq.s32.totalorder %s25, 1
      %p90 = por %p88, %p89
      %p91 = scmp.ne.s32.totalorder %s80, %s81
      %p92 = scmp.eq.s32.totalorder %s25, 0
      %p93 = por %p91, %p92
      %p94 = scmp.ne.s32.totalorder %s80, %s81
      %p95 = scmp.eq.s32.totalorder %s26, 1
      %p96 = por %p94, %p95
      %p98 = scmp.ne.s32.totalorder %s81, %s97
      %p99 = scmp.eq.s32.totalorder %s26, 0
      %p100 = por %p98, %p99
      %s101 = ssub.s32 %s20, %s27
      %p102 = scmp.eq.s32.totalorder %s101, 0
      %s104 = sadd.s32 %s103, 1
      %s105 = scalar_select %p102, %s103, %s104
      %p108 = pneg %p102
      %p109 = scmp.eq.s32.totalorder %s20, 1
      %p110 = por %p108, %p109
      %p111 = scmp.ne.s32.totalorder %s103, %s106
      %p112 = scmp.eq.s32.totalorder %s20, 0
      %p113 = por %p111, %p112
      %p114 = scmp.ne.s32.totalorder %s103, %s106
      %p115 = scmp.eq.s32.totalorder %s25, 1
      %p116 = por %p114, %p115
      %p117 = scmp.ne.s32.totalorder %s106, %s107
      %p118 = scmp.eq.s32.totalorder %s25, 0
      %p119 = por %p117, %p118
      %p120 = scmp.ne.s32.totalorder %s106, %s107
      %p121 = scmp.eq.s32.totalorder %s26, 1
      %p122 = por %p120, %p121
      %p124 = scmp.ne.s32.totalorder %s107, %s123
      %p125 = scmp.eq.s32.totalorder %s26, 0
      %p126 = por %p124, %p125
      %s127 = ssub.s32 %s20, %s27
      %p128 = scmp.eq.s32.totalorder %s127, 0
      %s130 = sadd.s32 %s129, 1
      %s131 = scalar_select %p128, %s129, %s130
      %p134 = pneg %p128
      %p135 = scmp.eq.s32.totalorder %s20, 1
      %p136 = por %p134, %p135
      %p137 = scmp.ne.s32.totalorder %s129, %s132
      %p138 = scmp.eq.s32.totalorder %s20, 0
      %p139 = por %p137, %p138
      %p140 = scmp.ne.s32.totalorder %s129, %s132
      %p141 = scmp.eq.s32.totalorder %s25, 1
      %p142 = por %p140, %p141
      %p143 = scmp.ne.s32.totalorder %s132, %s133
      %p144 = scmp.eq.s32.totalorder %s25, 0
      %p145 = por %p143, %p144
      %p146 = scmp.ne.s32.totalorder %s132, %s133
      %p147 = scmp.eq.s32.totalorder %s26, 1
      %p148 = por %p146, %p147
      %p150 = scmp.ne.s32.totalorder %s133, %s149
      %p151 = scmp.eq.s32.totalorder %s26, 0
      %p152 = por %p150, %p151
      %p153 = scmp.le.s32.totalorder 1, %s20
      %p154 = scmp.lt.s32.totalorder %s20, 3
      %p155 = pnand %p153, %p154
      %p156 = pneg %p155
      // Predicated region
      $region9: #{tpu_custom_call.1} parent=5 // pred_check
        _
      $region10: #{tpu_custom_call.1} parent=5 // pred_check_branch
        %158 = sbr.rel (%p155) target = $region12
      $region11: #{tpu_custom_call.1} parent=5 // pred_region
        %s159 = ssub.s32 %s20, 1
        // Predicated region
        $region13: #{tpu_custom_call.1} parent=11 // pred_check
          %p160 = pneg %p41
        $region14: #{tpu_custom_call.1} parent=11 // pred_check_branch
          %162 = sbr.rel (%p160) target = $region16
        $region15: #{tpu_custom_call.1} parent=11 // pred_region
          %s164 = ssub.s32 16, 16
          %165 = vsyncadd [#allocation5], %s164
          %168 = dma.hbm_to_smem %s0, 16, [#allocation2], [#allocation5]
        $region16: #{tpu_custom_call.1} parent=11 // pred_fallthru
          _
      $region12: #{tpu_custom_call.1} parent=5 // pred_fallthru
        _
      %p169 = scmp.lt.s32.totalorder %s20, 2
      // Predicated region
      $region17: #{tpu_custom_call.1} parent=5 // pred_check
        %p170 = pneg %p169
      $region18: #{tpu_custom_call.1} parent=5 // pred_check_branch
        %172 = sbr.rel (%p170) target = $region20
      $region19: #{tpu_custom_call.1} parent=5 // pred_region
        // Predicated region
        $region21: #{tpu_custom_call.1} parent=19 // pred_check
          %p173 = pneg %p61
        $region22: #{tpu_custom_call.1} parent=19 // pred_check_branch
          %175 = sbr.rel (%p173) target = $region24
        $region23: #{tpu_custom_call.1} parent=19 // pred_region
          %s176 = sand.u32 %s51, 1
          %s177 = scalar_lea.sflag [#allocation3], %s176
          %s178 = sand.u32 %s51, 1
          %s179 = smul.addr %s178, 2048
          %s180 = scalar_lea.vmem [#allocation6], %s179
          %s181 = smul.u32 64, %s20
          %s183 = ssub.s32 32768, 32768
          %184 = vsyncadd %s177, %s183
          %s185 = smul.addr %s181, 4
          %s186 = smul.addr %s185, 128
          %s187 = scalar_lea.hbm %s1, %s186
          %s188 = sshll.u32 %s180, 4
          %s189 = int_to_ptr.vmem [resolvable:$true] %s188
          %194 = dma.hbm_to_vmem [thread:$0]  %s187, 32768, %s189, %s177, 512, 512, 32
        $region24: #{tpu_custom_call.1} parent=19 // pred_fallthru
          _
        // Predicated region
        $region25: #{tpu_custom_call.1} parent=19 // pred_check
          %p195 = pneg %p87
        $region26: #{tpu_custom_call.1} parent=19 // pred_check_branch
          %197 = sbr.rel (%p195) target = $region28
        $region27: #{tpu_custom_call.1} parent=19 // pred_region
          %s198 = sand.u32 %s20, 1
          %s199 = scalar_lea.sflag [#allocation8], %s198
          %s200 = sand.u32 %s77, 1
          %s201 = smul.addr %s200, 2048
          %s202 = scalar_lea.vmem [#allocation7], %s201
          %s203 = smul.u32 64, %s20
          %s205 = ssub.s32 32768, 32768
          %206 = vsyncadd %s199, %s205
          %s207 = smul.addr %s203, 4
          %s208 = smul.addr %s207, 128
          %s209 = scalar_lea.hbm %s2, %s208
          %s210 = sshll.u32 %s202, 4
          %s211 = int_to_ptr.vmem [resolvable:$true] %s210
          %216 = dma.hbm_to_vmem [thread:$0]  %s209, 32768, %s211, %s199, 512, 512, 32
        $region28: #{tpu_custom_call.1} parent=19 // pred_fallthru
          _
        // Predicated region
        $region29: #{tpu_custom_call.1} parent=19 // pred_check
          %p217 = pneg %p113
        $region30: #{tpu_custom_call.1} parent=19 // pred_check_branch
          %219 = sbr.rel (%p217) target = $region32
        $region31: #{tpu_custom_call.1} parent=19 // pred_region
          %s220 = sand.u32 %s20, 1
          %s221 = scalar_lea.sflag [#allocation8], %s220
          %s222 = sand.u32 %s103, 1
          %s223 = smul.addr %s222, 2048
          %s224 = scalar_lea.vmem [#allocation9], %s223
          %s225 = smul.u32 64, %s20
          %s227 = ssub.s32 32768, 32768
          %228 = vsyncadd %s221, %s227
          %s229 = smul.addr %s225, 4
          %s230 = smul.addr %s229, 128
          %s231 = scalar_lea.hbm %s3, %s230
          %s232 = sshll.u32 %s224, 4
          %s233 = int_to_ptr.vmem [resolvable:$true] %s232
          %238 = dma.hbm_to_vmem [thread:$0]  %s231, 32768, %s233, %s221, 512, 512, 32
        $region32: #{tpu_custom_call.1} parent=19 // pred_fallthru
          _
      $region20: #{tpu_custom_call.1} parent=5 // pred_fallthru
        _
      %p239 = scmp.le.s32.totalorder 1, %s20
      %p240 = scmp.lt.s32.totalorder %s20, 3
      %p241 = pnand %p239, %p240
      %p242 = pneg %p241
      // Predicated region
      $region33: #{tpu_custom_call.1} parent=5 // pred_check
        _
      $region34: #{tpu_custom_call.1} parent=5 // pred_check_branch
        %244 = sbr.rel (%p241) target = $region36
      $region35: #{tpu_custom_call.1} parent=5 // pred_region
        %s245 = ssub.s32 %s20, 1
        // Predicated region
        $region37: #{tpu_custom_call.1} parent=35 // pred_check
          %p246 = pneg %p41
        $region38: #{tpu_custom_call.1} parent=35 // pred_check_branch
          %248 = sbr.rel (%p246) target = $region40
        $region39: #{tpu_custom_call.1} parent=35 // pred_region
          %249 = dma.done [#allocation5], 16
        $region40: #{tpu_custom_call.1} parent=35 // pred_fallthru
          _
        %s250 = sand.u32 %s54, 1
        %s251 = scalar_lea.sflag [#allocation3], %s250
        %s252 = sand.u32 %s54, 1
        %s253 = smul.addr %s252, 2048
        %s254 = scalar_lea.vmem [#allocation6], %s253
        // Predicated region
        $region41: #{tpu_custom_call.1} parent=35 // pred_check
          %p255 = pneg %p67
        $region42: #{tpu_custom_call.1} parent=35 // pred_check_branch
          %257 = sbr.rel (%p255) target = $region44
        $region43: #{tpu_custom_call.1} parent=35 // pred_region
          %258 = dma.done %s251, 32768
        $region44: #{tpu_custom_call.1} parent=35 // pred_fallthru
          _
        %s259 = sand.u32 %s25, 1
        %s260 = scalar_lea.sflag [#allocation8], %s259
        %s261 = sand.u32 %s80, 1
        %s262 = smul.addr %s261, 2048
        %s263 = scalar_lea.vmem [#allocation7], %s262
        // Predicated region
        $region45: #{tpu_custom_call.1} parent=35 // pred_check
          %p264 = pneg %p93
        $region46: #{tpu_custom_call.1} parent=35 // pred_check_branch
          %266 = sbr.rel (%p264) target = $region48
        $region47: #{tpu_custom_call.1} parent=35 // pred_region
          %267 = dma.done %s260, 32768
        $region48: #{tpu_custom_call.1} parent=35 // pred_fallthru
          _
        %s268 = sand.u32 %s25, 1
        %s269 = scalar_lea.sflag [#allocation8], %s268
        %s270 = sand.u32 %s106, 1
        %s271 = smul.addr %s270, 2048
        %s272 = scalar_lea.vmem [#allocation9], %s271
        // Predicated region
        $region49: #{tpu_custom_call.1} parent=35 // pred_check
          %p273 = pneg %p119
        $region50: #{tpu_custom_call.1} parent=35 // pred_check_branch
          %275 = sbr.rel (%p273) target = $region52
        $region51: #{tpu_custom_call.1} parent=35 // pred_region
          %276 = dma.done %s269, 32768
        $region52: #{tpu_custom_call.1} parent=35 // pred_fallthru
          _
        %277 = sfence
        %p278 = pneg %p41
        %p279 = pneg %p38
        %s280 = sand.u32 %s54, 1
        %s281 = scalar_lea.sflag [#allocation3], %s280
        %s282 = sand.u32 %s54, 1
        %s283 = smul.addr %s282, 2048
        %s284 = scalar_lea.vmem [#allocation6], %s283
        %p285 = pneg %p67
        %p286 = pneg %p64
        %s287 = sand.u32 %s25, 1
        %s288 = scalar_lea.sflag [#allocation8], %s287
        %s289 = sand.u32 %s80, 1
        %s290 = smul.addr %s289, 2048
        %s291 = scalar_lea.vmem [#allocation7], %s290
        %p292 = pneg %p93
        %p293 = pneg %p90
        %s294 = sand.u32 %s25, 1
        %s295 = scalar_lea.sflag [#allocation8], %s294
        %s296 = sand.u32 %s106, 1
        %s297 = smul.addr %s296, 2048
        %s298 = scalar_lea.vmem [#allocation9], %s297
        %p299 = pneg %p119
        %p300 = pneg %p116
        %p301 = pneg %p145
        %p302 = pneg %p142
        %s303 = sand.u32 %s132, 1
        %s304 = scalar_lea.sflag [#allocation4], %s303
        %s305 = sand.u32 %s132, 1
        %s306 = smul.addr %s305, 2048
        %s307 = scalar_lea.vmem [#allocation10], %s306
        %s308 = smul.u32 64, %s25
        %s309 = smul.u32 64, %s25
        %s310 = smul.u32 64, %s25
        %s311 = smul.u32 64, %s25
        %s312 = sld [smem:[#allocation2]]
        %v313 = vld [vmem:[%s254] sm:$0xff]
        %v314 = vld [vmem:[%s254 + $0x8] sm:$0xff]
        %v315 = vld [vmem:[%s254 + $0x10] sm:$0xff]
        %v316 = vld [vmem:[%s254 + $0x18] sm:$0xff]
        %v317 = vld [vmem:[%s254 + $0x20] sm:$0xff]
        %v318 = vld [vmem:[%s254 + $0x28] sm:$0xff]
        %v319 = vld [vmem:[%s254 + $0x30] sm:$0xff]
        %v320 = vld [vmem:[%s254 + $0x38] sm:$0xff]
        %v321 = vld [vmem:[%s254 + $0x40] sm:$0xff]
        %v322 = vld [vmem:[%s254 + $0x48] sm:$0xff]
        %v323 = vld [vmem:[%s254 + $0x50] sm:$0xff]
        %v324 = vld [vmem:[%s254 + $0x58] sm:$0xff]
        %v325 = vld [vmem:[%s254 + $0x60] sm:$0xff]
        %v326 = vld [vmem:[%s254 + $0x68] sm:$0xff]
        %v327 = vld [vmem:[%s254 + $0x70] sm:$0xff]
        %v328 = vld [vmem:[%s254 + $0x78] sm:$0xff]
        %v329 = vld [vmem:[%s254 + $0x80] sm:$0xff]
        %v330 = vld [vmem:[%s254 + $0x88] sm:$0xff]
        %v331 = vld [vmem:[%s254 + $0x90] sm:$0xff]
        %v332 = vld [vmem:[%s254 + $0x98] sm:$0xff]
        %v333 = vld [vmem:[%s254 + $0xa0] sm:$0xff]
        %v334 = vld [vmem:[%s254 + $0xa8] sm:$0xff]
        %v335 = vld [vmem:[%s254 + $0xb0] sm:$0xff]
        %v336 = vld [vmem:[%s254 + $0xb8] sm:$0xff]
        %v337 = vld [vmem:[%s254 + $0xc0] sm:$0xff]
        %v338 = vld [vmem:[%s254 + $0xc8] sm:$0xff]
        %v339 = vld [vmem:[%s254 + $0xd0] sm:$0xff]
        %v340 = vld [vmem:[%s254 + $0xd8] sm:$0xff]
        %v341 = vld [vmem:[%s254 + $0xe0] sm:$0xff]
        %v342 = vld [vmem:[%s254 + $0xe8] sm:$0xff]
        %v343 = vld [vmem:[%s254 + $0xf0] sm:$0xff]
        %v344 = vld [vmem:[%s254 + $0xf8] sm:$0xff]
        %v345 = vld [vmem:[%s254 + $0x100] sm:$0xff]
        %v346 = vld [vmem:[%s254 + $0x108] sm:$0xff]
        %v347 = vld [vmem:[%s254 + $0x110] sm:$0xff]
        %v348 = vld [vmem:[%s254 + $0x118] sm:$0xff]
        %v349 = vld [vmem:[%s254 + $0x120] sm:$0xff]
        %v350 = vld [vmem:[%s254 + $0x128] sm:$0xff]
        %v351 = vld [vmem:[%s254 + $0x130] sm:$0xff]
        %v352 = vld [vmem:[%s254 + $0x138] sm:$0xff]
        %v353 = vld [vmem:[%s254 + $0x140] sm:$0xff]
        %v354 = vld [vmem:[%s254 + $0x148] sm:$0xff]
        %v355 = vld [vmem:[%s254 + $0x150] sm:$0xff]
        %v356 = vld [vmem:[%s254 + $0x158] sm:$0xff]
        %v357 = vld [vmem:[%s254 + $0x160] sm:$0xff]
        %v358 = vld [vmem:[%s254 + $0x168] sm:$0xff]
        %v359 = vld [vmem:[%s254 + $0x170] sm:$0xff]
        %v360 = vld [vmem:[%s254 + $0x178] sm:$0xff]
        %v361 = vld [vmem:[%s254 + $0x180] sm:$0xff]
        %v362 = vld [vmem:[%s254 + $0x188] sm:$0xff]
        %v363 = vld [vmem:[%s254 + $0x190] sm:$0xff]
        %v364 = vld [vmem:[%s254 + $0x198] sm:$0xff]
        %v365 = vld [vmem:[%s254 + $0x1a0] sm:$0xff]
        %v366 = vld [vmem:[%s254 + $0x1a8] sm:$0xff]
        %v367 = vld [vmem:[%s254 + $0x1b0] sm:$0xff]
        %v368 = vld [vmem:[%s254 + $0x1b8] sm:$0xff]
        %v369 = vld [vmem:[%s254 + $0x1c0] sm:$0xff]
        %v370 = vld [vmem:[%s254 + $0x1c8] sm:$0xff]
        %v371 = vld [vmem:[%s254 + $0x1d0] sm:$0xff]
        %v372 = vld [vmem:[%s254 + $0x1d8] sm:$0xff]
        %v373 = vld [vmem:[%s254 + $0x1e0] sm:$0xff]
        %v374 = vld [vmem:[%s254 + $0x1e8] sm:$0xff]
        %v375 = vld [vmem:[%s254 + $0x1f0] sm:$0xff]
        %v376 = vld [vmem:[%s254 + $0x1f8] sm:$0xff]
        %v377 = vld [vmem:[%s254 + $0x200] sm:$0xff]
        %v378 = vld [vmem:[%s254 + $0x208] sm:$0xff]
        %v379 = vld [vmem:[%s254 + $0x210] sm:$0xff]
        %v380 = vld [vmem:[%s254 + $0x218] sm:$0xff]
        %v381 = vld [vmem:[%s254 + $0x220] sm:$0xff]
        %v382 = vld [vmem:[%s254 + $0x228] sm:$0xff]
        %v383 = vld [vmem:[%s254 + $0x230] sm:$0xff]
        %v384 = vld [vmem:[%s254 + $0x238] sm:$0xff]
        %v385 = vld [vmem:[%s254 + $0x240] sm:$0xff]
        %v386 = vld [vmem:[%s254 + $0x248] sm:$0xff]
        %v387 = vld [vmem:[%s254 + $0x250] sm:$0xff]
        %v388 = vld [vmem:[%s254 + $0x258] sm:$0xff]
        %v389 = vld [vmem:[%s254 + $0x260] sm:$0xff]
        %v390 = vld [vmem:[%s254 + $0x268] sm:$0xff]
        %v391 = vld [vmem:[%s254 + $0x270] sm:$0xff]
        %v392 = vld [vmem:[%s254 + $0x278] sm:$0xff]
        %v393 = vld [vmem:[%s254 + $0x280] sm:$0xff]
        %v394 = vld [vmem:[%s254 + $0x288] sm:$0xff]
        %v395 = vld [vmem:[%s254 + $0x290] sm:$0xff]
        %v396 = vld [vmem:[%s254 + $0x298] sm:$0xff]
        %v397 = vld [vmem:[%s254 + $0x2a0] sm:$0xff]
        %v398 = vld [vmem:[%s254 + $0x2a8] sm:$0xff]
        %v399 = vld [vmem:[%s254 + $0x2b0] sm:$0xff]
        %v400 = vld [vmem:[%s254 + $0x2b8] sm:$0xff]
        %v401 = vld [vmem:[%s254 + $0x2c0] sm:$0xff]
        %v402 = vld [vmem:[%s254 + $0x2c8] sm:$0xff]
        %v403 = vld [vmem:[%s254 + $0x2d0] sm:$0xff]
        %v404 = vld [vmem:[%s254 + $0x2d8] sm:$0xff]
        %v405 = vld [vmem:[%s254 + $0x2e0] sm:$0xff]
        %v406 = vld [vmem:[%s254 + $0x2e8] sm:$0xff]
        %v407 = vld [vmem:[%s254 + $0x2f0] sm:$0xff]
        %v408 = vld [vmem:[%s254 + $0x2f8] sm:$0xff]
        %v409 = vld [vmem:[%s254 + $0x300] sm:$0xff]
        %v410 = vld [vmem:[%s254 + $0x308] sm:$0xff]
        %v411 = vld [vmem:[%s254 + $0x310] sm:$0xff]
        %v412 = vld [vmem:[%s254 + $0x318] sm:$0xff]
        %v413 = vld [vmem:[%s254 + $0x320] sm:$0xff]
        %v414 = vld [vmem:[%s254 + $0x328] sm:$0xff]
        %v415 = vld [vmem:[%s254 + $0x330] sm:$0xff]
        %v416 = vld [vmem:[%s254 + $0x338] sm:$0xff]
        %v417 = vld [vmem:[%s254 + $0x340] sm:$0xff]
        %v418 = vld [vmem:[%s254 + $0x348] sm:$0xff]
        %v419 = vld [vmem:[%s254 + $0x350] sm:$0xff]
        %v420 = vld [vmem:[%s254 + $0x358] sm:$0xff]
        %v421 = vld [vmem:[%s254 + $0x360] sm:$0xff]
        %v422 = vld [vmem:[%s254 + $0x368] sm:$0xff]
        %v423 = vld [vmem:[%s254 + $0x370] sm:$0xff]
        %v424 = vld [vmem:[%s254 + $0x378] sm:$0xff]
        %v425 = vld [vmem:[%s254 + $0x380] sm:$0xff]
        %v426 = vld [vmem:[%s254 + $0x388] sm:$0xff]
        %v427 = vld [vmem:[%s254 + $0x390] sm:$0xff]
        %v428 = vld [vmem:[%s254 + $0x398] sm:$0xff]
        %v429 = vld [vmem:[%s254 + $0x3a0] sm:$0xff]
        %v430 = vld [vmem:[%s254 + $0x3a8] sm:$0xff]
        %v431 = vld [vmem:[%s254 + $0x3b0] sm:$0xff]
        %v432 = vld [vmem:[%s254 + $0x3b8] sm:$0xff]
        %v433 = vld [vmem:[%s254 + $0x3c0] sm:$0xff]
        %v434 = vld [vmem:[%s254 + $0x3c8] sm:$0xff]
        %v435 = vld [vmem:[%s254 + $0x3d0] sm:$0xff]
        %v436 = vld [vmem:[%s254 + $0x3d8] sm:$0xff]
        %v437 = vld [vmem:[%s254 + $0x3e0] sm:$0xff]
        %v438 = vld [vmem:[%s254 + $0x3e8] sm:$0xff]
        %v439 = vld [vmem:[%s254 + $0x3f0] sm:$0xff]
        %v440 = vld [vmem:[%s254 + $0x3f8] sm:$0xff]
        %v441 = vld [vmem:[%s254 + $0x400] sm:$0xff]
        %v442 = vld [vmem:[%s254 + $0x408] sm:$0xff]
        %v443 = vld [vmem:[%s254 + $0x410] sm:$0xff]
        %v444 = vld [vmem:[%s254 + $0x418] sm:$0xff]
        %v445 = vld [vmem:[%s254 + $0x420] sm:$0xff]
        %v446 = vld [vmem:[%s254 + $0x428] sm:$0xff]
        %v447 = vld [vmem:[%s254 + $0x430] sm:$0xff]
        %v448 = vld [vmem:[%s254 + $0x438] sm:$0xff]
        %v449 = vld [vmem:[%s254 + $0x440] sm:$0xff]
        %v450 = vld [vmem:[%s254 + $0x448] sm:$0xff]
        %v451 = vld [vmem:[%s254 + $0x450] sm:$0xff]
        %v452 = vld [vmem:[%s254 + $0x458] sm:$0xff]
        %v453 = vld [vmem:[%s254 + $0x460] sm:$0xff]
        %v454 = vld [vmem:[%s254 + $0x468] sm:$0xff]
        %v455 = vld [vmem:[%s254 + $0x470] sm:$0xff]
        %v456 = vld [vmem:[%s254 + $0x478] sm:$0xff]
        %v457 = vld [vmem:[%s254 + $0x480] sm:$0xff]
        %v458 = vld [vmem:[%s254 + $0x488] sm:$0xff]
        %v459 = vld [vmem:[%s254 + $0x490] sm:$0xff]
        %v460 = vld [vmem:[%s254 + $0x498] sm:$0xff]
        %v461 = vld [vmem:[%s254 + $0x4a0] sm:$0xff]
        %v462 = vld [vmem:[%s254 + $0x4a8] sm:$0xff]
        %v463 = vld [vmem:[%s254 + $0x4b0] sm:$0xff]
        %v464 = vld [vmem:[%s254 + $0x4b8] sm:$0xff]
        %v465 = vld [vmem:[%s254 + $0x4c0] sm:$0xff]
        %v466 = vld [vmem:[%s254 + $0x4c8] sm:$0xff]
        %v467 = vld [vmem:[%s254 + $0x4d0] sm:$0xff]
        %v468 = vld [vmem:[%s254 + $0x4d8] sm:$0xff]
        %v469 = vld [vmem:[%s254 + $0x4e0] sm:$0xff]
        %v470 = vld [vmem:[%s254 + $0x4e8] sm:$0xff]
        %v471 = vld [vmem:[%s254 + $0x4f0] sm:$0xff]
        %v472 = vld [vmem:[%s254 + $0x4f8] sm:$0xff]
        %v473 = vld [vmem:[%s254 + $0x500] sm:$0xff]
        %v474 = vld [vmem:[%s254 + $0x508] sm:$0xff]
        %v475 = vld [vmem:[%s254 + $0x510] sm:$0xff]
        %v476 = vld [vmem:[%s254 + $0x518] sm:$0xff]
        %v477 = vld [vmem:[%s254 + $0x520] sm:$0xff]
        %v478 = vld [vmem:[%s254 + $0x528] sm:$0xff]
        %v479 = vld [vmem:[%s254 + $0x530] sm:$0xff]
        %v480 = vld [vmem:[%s254 + $0x538] sm:$0xff]
        %v481 = vld [vmem:[%s254 + $0x540] sm:$0xff]
        %v482 = vld [vmem:[%s254 + $0x548] sm:$0xff]
        %v483 = vld [vmem:[%s254 + $0x550] sm:$0xff]
        %v484 = vld [vmem:[%s254 + $0x558] sm:$0xff]
        %v485 = vld [vmem:[%s254 + $0x560] sm:$0xff]
        %v486 = vld [vmem:[%s254 + $0x568] sm:$0xff]
        %v487 = vld [vmem:[%s254 + $0x570] sm:$0xff]
        %v488 = vld [vmem:[%s254 + $0x578] sm:$0xff]
        %v489 = vld [vmem:[%s254 + $0x580] sm:$0xff]
        %v490 = vld [vmem:[%s254 + $0x588] sm:$0xff]
        %v491 = vld [vmem:[%s254 + $0x590] sm:$0xff]
        %v492 = vld [vmem:[%s254 + $0x598] sm:$0xff]
        %v493 = vld [vmem:[%s254 + $0x5a0] sm:$0xff]
        %v494 = vld [vmem:[%s254 + $0x5a8] sm:$0xff]
        %v495 = vld [vmem:[%s254 + $0x5b0] sm:$0xff]
        %v496 = vld [vmem:[%s254 + $0x5b8] sm:$0xff]
        %v497 = vld [vmem:[%s254 + $0x5c0] sm:$0xff]
        %v498 = vld [vmem:[%s254 + $0x5c8] sm:$0xff]
        %v499 = vld [vmem:[%s254 + $0x5d0] sm:$0xff]
        %v500 = vld [vmem:[%s254 + $0x5d8] sm:$0xff]
        %v501 = vld [vmem:[%s254 + $0x5e0] sm:$0xff]
        %v502 = vld [vmem:[%s254 + $0x5e8] sm:$0xff]
        %v503 = vld [vmem:[%s254 + $0x5f0] sm:$0xff]
        %v504 = vld [vmem:[%s254 + $0x5f8] sm:$0xff]
        %v505 = vld [vmem:[%s254 + $0x600] sm:$0xff]
        %v506 = vld [vmem:[%s254 + $0x608] sm:$0xff]
        %v507 = vld [vmem:[%s254 + $0x610] sm:$0xff]
        %v508 = vld [vmem:[%s254 + $0x618] sm:$0xff]
        %v509 = vld [vmem:[%s254 + $0x620] sm:$0xff]
        %v510 = vld [vmem:[%s254 + $0x628] sm:$0xff]
        %v511 = vld [vmem:[%s254 + $0x630] sm:$0xff]
        %v512 = vld [vmem:[%s254 + $0x638] sm:$0xff]
        %v513 = vld [vmem:[%s254 + $0x640] sm:$0xff]
        %v514 = vld [vmem:[%s254 + $0x648] sm:$0xff]
        %v515 = vld [vmem:[%s254 + $0x650] sm:$0xff]
        %v516 = vld [vmem:[%s254 + $0x658] sm:$0xff]
        %v517 = vld [vmem:[%s254 + $0x660] sm:$0xff]
        %v518 = vld [vmem:[%s254 + $0x668] sm:$0xff]
        %v519 = vld [vmem:[%s254 + $0x670] sm:$0xff]
        %v520 = vld [vmem:[%s254 + $0x678] sm:$0xff]
        %v521 = vld [vmem:[%s254 + $0x680] sm:$0xff]
        %v522 = vld [vmem:[%s254 + $0x688] sm:$0xff]
        %v523 = vld [vmem:[%s254 + $0x690] sm:$0xff]
        %v524 = vld [vmem:[%s254 + $0x698] sm:$0xff]
        %v525 = vld [vmem:[%s254 + $0x6a0] sm:$0xff]
        %v526 = vld [vmem:[%s254 + $0x6a8] sm:$0xff]
        %v527 = vld [vmem:[%s254 + $0x6b0] sm:$0xff]
        %v528 = vld [vmem:[%s254 + $0x6b8] sm:$0xff]
        %v529 = vld [vmem:[%s254 + $0x6c0] sm:$0xff]
        %v530 = vld [vmem:[%s254 + $0x6c8] sm:$0xff]
        %v531 = vld [vmem:[%s254 + $0x6d0] sm:$0xff]
        %v532 = vld [vmem:[%s254 + $0x6d8] sm:$0xff]
        %v533 = vld [vmem:[%s254 + $0x6e0] sm:$0xff]
        %v534 = vld [vmem:[%s254 + $0x6e8] sm:$0xff]
        %v535 = vld [vmem:[%s254 + $0x6f0] sm:$0xff]
        %v536 = vld [vmem:[%s254 + $0x6f8] sm:$0xff]
        %v537 = vld [vmem:[%s254 + $0x700] sm:$0xff]
        %v538 = vld [vmem:[%s254 + $0x708] sm:$0xff]
        %v539 = vld [vmem:[%s254 + $0x710] sm:$0xff]
        %v540 = vld [vmem:[%s254 + $0x718] sm:$0xff]
        %v541 = vld [vmem:[%s254 + $0x720] sm:$0xff]
        %v542 = vld [vmem:[%s254 + $0x728] sm:$0xff]
        %v543 = vld [vmem:[%s254 + $0x730] sm:$0xff]
        %v544 = vld [vmem:[%s254 + $0x738] sm:$0xff]
        %v545 = vld [vmem:[%s254 + $0x740] sm:$0xff]
        %v546 = vld [vmem:[%s254 + $0x748] sm:$0xff]
        %v547 = vld [vmem:[%s254 + $0x750] sm:$0xff]
        %v548 = vld [vmem:[%s254 + $0x758] sm:$0xff]
        %v549 = vld [vmem:[%s254 + $0x760] sm:$0xff]
        %v550 = vld [vmem:[%s254 + $0x768] sm:$0xff]
        %v551 = vld [vmem:[%s254 + $0x770] sm:$0xff]
        %v552 = vld [vmem:[%s254 + $0x778] sm:$0xff]
        %v553 = vld [vmem:[%s254 + $0x780] sm:$0xff]
        %v554 = vld [vmem:[%s254 + $0x788] sm:$0xff]
        %v555 = vld [vmem:[%s254 + $0x790] sm:$0xff]
        %v556 = vld [vmem:[%s254 + $0x798] sm:$0xff]
        %v557 = vld [vmem:[%s254 + $0x7a0] sm:$0xff]
        %v558 = vld [vmem:[%s254 + $0x7a8] sm:$0xff]
        %v559 = vld [vmem:[%s254 + $0x7b0] sm:$0xff]
        %v560 = vld [vmem:[%s254 + $0x7b8] sm:$0xff]
        %v561 = vld [vmem:[%s254 + $0x7c0] sm:$0xff]
        %v562 = vld [vmem:[%s254 + $0x7c8] sm:$0xff]
        %v563 = vld [vmem:[%s254 + $0x7d0] sm:$0xff]
        %v564 = vld [vmem:[%s254 + $0x7d8] sm:$0xff]
        %v565 = vld [vmem:[%s254 + $0x7e0] sm:$0xff]
        %v566 = vld [vmem:[%s254 + $0x7e8] sm:$0xff]
        %v567 = vld [vmem:[%s254 + $0x7f0] sm:$0xff]
        %v568 = vld [vmem:[%s254 + $0x7f8] sm:$0xff]
        %v569 = vstv %s312
        %v570 = vmul.f32 %v569, %v313
        %v571 = vmul.f32 %v569, %v314
        %v572 = vmul.f32 %v569, %v315
        %v573 = vmul.f32 %v569, %v316
        %v574 = vmul.f32 %v569, %v317
        %v575 = vmul.f32 %v569, %v318
        %v576 = vmul.f32 %v569, %v319
        %v577 = vmul.f32 %v569, %v320
        %v578 = vmul.f32 %v569, %v321
        %v579 = vmul.f32 %v569, %v322
        %v580 = vmul.f32 %v569, %v323
        %v581 = vmul.f32 %v569, %v324
        %v582 = vmul.f32 %v569, %v325
        %v583 = vmul.f32 %v569, %v326
        %v584 = vmul.f32 %v569, %v327
        %v585 = vmul.f32 %v569, %v328
        %v586 = vmul.f32 %v569, %v329
        %v587 = vmul.f32 %v569, %v330
        %v588 = vmul.f32 %v569, %v331
        %v589 = vmul.f32 %v569, %v332
        %v590 = vmul.f32 %v569, %v333
        %v591 = vmul.f32 %v569, %v334
        %v592 = vmul.f32 %v569, %v335
        %v593 = vmul.f32 %v569, %v336
        %v594 = vmul.f32 %v569, %v337
        %v595 = vmul.f32 %v569, %v338
        %v596 = vmul.f32 %v569, %v339
        %v597 = vmul.f32 %v569, %v340
        %v598 = vmul.f32 %v569, %v341
        %v599 = vmul.f32 %v569, %v342
        %v600 = vmul.f32 %v569, %v343
        %v601 = vmul.f32 %v569, %v344
        %v602 = vmul.f32 %v569, %v345
        %v603 = vmul.f32 %v569, %v346
        %v604 = vmul.f32 %v569, %v347
        %v605 = vmul.f32 %v569, %v348
        %v606 = vmul.f32 %v569, %v349
        %v607 = vmul.f32 %v569, %v350
        %v608 = vmul.f32 %v569, %v351
        %v609 = vmul.f32 %v569, %v352
        %v610 = vmul.f32 %v569, %v353
        %v611 = vmul.f32 %v569, %v354
        %v612 = vmul.f32 %v569, %v355
        %v613 = vmul.f32 %v569, %v356
        %v614 = vmul.f32 %v569, %v357
        %v615 = vmul.f32 %v569, %v358
        %v616 = vmul.f32 %v569, %v359
        %v617 = vmul.f32 %v569, %v360
        %v618 = vmul.f32 %v569, %v361
        %v619 = vmul.f32 %v569, %v362
        %v620 = vmul.f32 %v569, %v363
        %v621 = vmul.f32 %v569, %v364
        %v622 = vmul.f32 %v569, %v365
        %v623 = vmul.f32 %v569, %v366
        %v624 = vmul.f32 %v569, %v367
        %v625 = vmul.f32 %v569, %v368
        %v626 = vmul.f32 %v569, %v369
        %v627 = vmul.f32 %v569, %v370
        %v628 = vmul.f32 %v569, %v371
        %v629 = vmul.f32 %v569, %v372
        %v630 = vmul.f32 %v569, %v373
        %v631 = vmul.f32 %v569, %v374
        %v632 = vmul.f32 %v569, %v375
        %v633 = vmul.f32 %v569, %v376
        %v634 = vmul.f32 %v569, %v377
        %v635 = vmul.f32 %v569, %v378
        %v636 = vmul.f32 %v569, %v379
        %v637 = vmul.f32 %v569, %v380
        %v638 = vmul.f32 %v569, %v381
        %v639 = vmul.f32 %v569, %v382
        %v640 = vmul.f32 %v569, %v383
        %v641 = vmul.f32 %v569, %v384
        %v642 = vmul.f32 %v569, %v385
        %v643 = vmul.f32 %v569, %v386
        %v644 = vmul.f32 %v569, %v387
        %v645 = vmul.f32 %v569, %v388
        %v646 = vmul.f32 %v569, %v389
        %v647 = vmul.f32 %v569, %v390
        %v648 = vmul.f32 %v569, %v391
        %v649 = vmul.f32 %v569, %v392
        %v650 = vmul.f32 %v569, %v393
        %v651 = vmul.f32 %v569, %v394
        %v652 = vmul.f32 %v569, %v395
        %v653 = vmul.f32 %v569, %v396
        %v654 = vmul.f32 %v569, %v397
        %v655 = vmul.f32 %v569, %v398
        %v656 = vmul.f32 %v569, %v399
        %v657 = vmul.f32 %v569, %v400
        %v658 = vmul.f32 %v569, %v401
        %v659 = vmul.f32 %v569, %v402
        %v660 = vmul.f32 %v569, %v403
        %v661 = vmul.f32 %v569, %v404
        %v662 = vmul.f32 %v569, %v405
        %v663 = vmul.f32 %v569, %v406
        %v664 = vmul.f32 %v569, %v407
        %v665 = vmul.f32 %v569, %v408
        %v666 = vmul.f32 %v569, %v409
        %v667 = vmul.f32 %v569, %v410
        %v668 = vmul.f32 %v569, %v411
        %v669 = vmul.f32 %v569, %v412
        %v670 = vmul.f32 %v569, %v413
        %v671 = vmul.f32 %v569, %v414
        %v672 = vmul.f32 %v569, %v415
        %v673 = vmul.f32 %v569, %v416
        %v674 = vmul.f32 %v569, %v417
        %v675 = vmul.f32 %v569, %v418
        %v676 = vmul.f32 %v569, %v419
        %v677 = vmul.f32 %v569, %v420
        %v678 = vmul.f32 %v569, %v421
        %v679 = vmul.f32 %v569, %v422
        %v680 = vmul.f32 %v569, %v423
        %v681 = vmul.f32 %v569, %v424
        %v682 = vmul.f32 %v569, %v425
        %v683 = vmul.f32 %v569, %v426
        %v684 = vmul.f32 %v569, %v427
        %v685 = vmul.f32 %v569, %v428
        %v686 = vmul.f32 %v569, %v429
        %v687 = vmul.f32 %v569, %v430
        %v688 = vmul.f32 %v569, %v431
        %v689 = vmul.f32 %v569, %v432
        %v690 = vmul.f32 %v569, %v433
        %v691 = vmul.f32 %v569, %v434
        %v692 = vmul.f32 %v569, %v435
        %v693 = vmul.f32 %v569, %v436
        %v694 = vmul.f32 %v569, %v437
        %v695 = vmul.f32 %v569, %v438
        %v696 = vmul.f32 %v569, %v439
        %v697 = vmul.f32 %v569, %v440
        %v698 = vmul.f32 %v569, %v441
        %v699 = vmul.f32 %v569, %v442
        %v700 = vmul.f32 %v569, %v443
        %v701 = vmul.f32 %v569, %v444
        %v702 = vmul.f32 %v569, %v445
        %v703 = vmul.f32 %v569, %v446
        %v704 = vmul.f32 %v569, %v447
        %v705 = vmul.f32 %v569, %v448
        %v706 = vmul.f32 %v569, %v449
        %v707 = vmul.f32 %v569, %v450
        %v708 = vmul.f32 %v569, %v451
        %v709 = vmul.f32 %v569, %v452
        %v710 = vmul.f32 %v569, %v453
        %v711 = vmul.f32 %v569, %v454
        %v712 = vmul.f32 %v569, %v455
        %v713 = vmul.f32 %v569, %v456
        %v714 = vmul.f32 %v569, %v457
        %v715 = vmul.f32 %v569, %v458
        %v716 = vmul.f32 %v569, %v459
        %v717 = vmul.f32 %v569, %v460
        %v718 = vmul.f32 %v569, %v461
        %v719 = vmul.f32 %v569, %v462
        %v720 = vmul.f32 %v569, %v463
        %v721 = vmul.f32 %v569, %v464
        %v722 = vmul.f32 %v569, %v465
        %v723 = vmul.f32 %v569, %v466
        %v724 = vmul.f32 %v569, %v467
        %v725 = vmul.f32 %v569, %v468
        %v726 = vmul.f32 %v569, %v469
        %v727 = vmul.f32 %v569, %v470
        %v728 = vmul.f32 %v569, %v471
        %v729 = vmul.f32 %v569, %v472
        %v730 = vmul.f32 %v569, %v473
        %v731 = vmul.f32 %v569, %v474
        %v732 = vmul.f32 %v569, %v475
        %v733 = vmul.f32 %v569, %v476
        %v734 = vmul.f32 %v569, %v477
        %v735 = vmul.f32 %v569, %v478
        %v736 = vmul.f32 %v569, %v479
        %v737 = vmul.f32 %v569, %v480
        %v738 = vmul.f32 %v569, %v481
        %v739 = vmul.f32 %v569, %v482
        %v740 = vmul.f32 %v569, %v483
        %v741 = vmul.f32 %v569, %v484
        %v742 = vmul.f32 %v569, %v485
        %v743 = vmul.f32 %v569, %v486
        %v744 = vmul.f32 %v569, %v487
        %v745 = vmul.f32 %v569, %v488
        %v746 = vmul.f32 %v569, %v489
        %v747 = vmul.f32 %v569, %v490
        %v748 = vmul.f32 %v569, %v491
        %v749 = vmul.f32 %v569, %v492
        %v750 = vmul.f32 %v569, %v493
        %v751 = vmul.f32 %v569, %v494
        %v752 = vmul.f32 %v569, %v495
        %v753 = vmul.f32 %v569, %v496
        %v754 = vmul.f32 %v569, %v497
        %v755 = vmul.f32 %v569, %v498
        %v756 = vmul.f32 %v569, %v499
        %v757 = vmul.f32 %v569, %v500
        %v758 = vmul.f32 %v569, %v501
        %v759 = vmul.f32 %v569, %v502
        %v760 = vmul.f32 %v569, %v503
        %v761 = vmul.f32 %v569, %v504
        %v762 = vmul.f32 %v569, %v505
        %v763 = vmul.f32 %v569, %v506
        %v764 = vmul.f32 %v569, %v507
        %v765 = vmul.f32 %v569, %v508
        %v766 = vmul.f32 %v569, %v509
        %v767 = vmul.f32 %v569, %v510
        %v768 = vmul.f32 %v569, %v511
        %v769 = vmul.f32 %v569, %v512
        %v770 = vmul.f32 %v569, %v513
        %v771 = vmul.f32 %v569, %v514
        %v772 = vmul.f32 %v569, %v515
        %v773 = vmul.f32 %v569, %v516
        %v774 = vmul.f32 %v569, %v517
        %v775 = vmul.f32 %v569, %v518
        %v776 = vmul.f32 %v569, %v519
        %v777 = vmul.f32 %v569, %v520
        %v778 = vmul.f32 %v569, %v521
        %v779 = vmul.f32 %v569, %v522
        %v780 = vmul.f32 %v569, %v523
        %v781 = vmul.f32 %v569, %v524
        %v782 = vmul.f32 %v569, %v525
        %v783 = vmul.f32 %v569, %v526
        %v784 = vmul.f32 %v569, %v527
        %v785 = vmul.f32 %v569, %v528
        %v786 = vmul.f32 %v569, %v529
        %v787 = vmul.f32 %v569, %v530
        %v788 = vmul.f32 %v569, %v531
        %v789 = vmul.f32 %v569, %v532
        %v790 = vmul.f32 %v569, %v533
        %v791 = vmul.f32 %v569, %v534
        %v792 = vmul.f32 %v569, %v535
        %v793 = vmul.f32 %v569, %v536
        %v794 = vmul.f32 %v569, %v537
        %v795 = vmul.f32 %v569, %v538
        %v796 = vmul.f32 %v569, %v539
        %v797 = vmul.f32 %v569, %v540
        %v798 = vmul.f32 %v569, %v541
        %v799 = vmul.f32 %v569, %v542
        %v800 = vmul.f32 %v569, %v543
        %v801 = vmul.f32 %v569, %v544
        %v802 = vmul.f32 %v569, %v545
        %v803 = vmul.f32 %v569, %v546
        %v804 = vmul.f32 %v569, %v547
        %v805 = vmul.f32 %v569, %v548
        %v806 = vmul.f32 %v569, %v549
        %v807 = vmul.f32 %v569, %v550
        %v808 = vmul.f32 %v569, %v551
        %v809 = vmul.f32 %v569, %v552
        %v810 = vmul.f32 %v569, %v553
        %v811 = vmul.f32 %v569, %v554
        %v812 = vmul.f32 %v569, %v555
        %v813 = vmul.f32 %v569, %v556
        %v814 = vmul.f32 %v569, %v557
        %v815 = vmul.f32 %v569, %v558
        %v816 = vmul.f32 %v569, %v559
        %v817 = vmul.f32 %v569, %v560
        %v818 = vmul.f32 %v569, %v561
        %v819 = vmul.f32 %v569, %v562
        %v820 = vmul.f32 %v569, %v563
        %v821 = vmul.f32 %v569, %v564
        %v822 = vmul.f32 %v569, %v565
        %v823 = vmul.f32 %v569, %v566
        %v824 = vmul.f32 %v569, %v567
        %v825 = vmul.f32 %v569, %v568
        %s826 = sld [smem:[#allocation2 + $0x1]]
        %v827 = vld [vmem:[%s263] sm:$0xff]
        %v828 = vld [vmem:[%s263 + $0x8] sm:$0xff]
        %v829 = vld [vmem:[%s263 + $0x10] sm:$0xff]
        %v830 = vld [vmem:[%s263 + $0x18] sm:$0xff]
        %v831 = vld [vmem:[%s263 + $0x20] sm:$0xff]
        %v832 = vld [vmem:[%s263 + $0x28] sm:$0xff]
        %v833 = vld [vmem:[%s263 + $0x30] sm:$0xff]
        %v834 = vld [vmem:[%s263 + $0x38] sm:$0xff]
        %v835 = vld [vmem:[%s263 + $0x40] sm:$0xff]
        %v836 = vld [vmem:[%s263 + $0x48] sm:$0xff]
        %v837 = vld [vmem:[%s263 + $0x50] sm:$0xff]
        %v838 = vld [vmem:[%s263 + $0x58] sm:$0xff]
        %v839 = vld [vmem:[%s263 + $0x60] sm:$0xff]
        %v840 = vld [vmem:[%s263 + $0x68] sm:$0xff]
        %v841 = vld [vmem:[%s263 + $0x70] sm:$0xff]
        %v842 = vld [vmem:[%s263 + $0x78] sm:$0xff]
        %v843 = vld [vmem:[%s263 + $0x80] sm:$0xff]
        %v844 = vld [vmem:[%s263 + $0x88] sm:$0xff]
        %v845 = vld [vmem:[%s263 + $0x90] sm:$0xff]
        %v846 = vld [vmem:[%s263 + $0x98] sm:$0xff]
        %v847 = vld [vmem:[%s263 + $0xa0] sm:$0xff]
        %v848 = vld [vmem:[%s263 + $0xa8] sm:$0xff]
        %v849 = vld [vmem:[%s263 + $0xb0] sm:$0xff]
        %v850 = vld [vmem:[%s263 + $0xb8] sm:$0xff]
        %v851 = vld [vmem:[%s263 + $0xc0] sm:$0xff]
        %v852 = vld [vmem:[%s263 + $0xc8] sm:$0xff]
        %v853 = vld [vmem:[%s263 + $0xd0] sm:$0xff]
        %v854 = vld [vmem:[%s263 + $0xd8] sm:$0xff]
        %v855 = vld [vmem:[%s263 + $0xe0] sm:$0xff]
        %v856 = vld [vmem:[%s263 + $0xe8] sm:$0xff]
        %v857 = vld [vmem:[%s263 + $0xf0] sm:$0xff]
        %v858 = vld [vmem:[%s263 + $0xf8] sm:$0xff]
        %v859 = vld [vmem:[%s263 + $0x100] sm:$0xff]
        %v860 = vld [vmem:[%s263 + $0x108] sm:$0xff]
        %v861 = vld [vmem:[%s263 + $0x110] sm:$0xff]
        %v862 = vld [vmem:[%s263 + $0x118] sm:$0xff]
        %v863 = vld [vmem:[%s263 + $0x120] sm:$0xff]
        %v864 = vld [vmem:[%s263 + $0x128] sm:$0xff]
        %v865 = vld [vmem:[%s263 + $0x130] sm:$0xff]
        %v866 = vld [vmem:[%s263 + $0x138] sm:$0xff]
        %v867 = vld [vmem:[%s263 + $0x140] sm:$0xff]
        %v868 = vld [vmem:[%s263 + $0x148] sm:$0xff]
        %v869 = vld [vmem:[%s263 + $0x150] sm:$0xff]
        %v870 = vld [vmem:[%s263 + $0x158] sm:$0xff]
        %v871 = vld [vmem:[%s263 + $0x160] sm:$0xff]
        %v872 = vld [vmem:[%s263 + $0x168] sm:$0xff]
        %v873 = vld [vmem:[%s263 + $0x170] sm:$0xff]
        %v874 = vld [vmem:[%s263 + $0x178] sm:$0xff]
        %v875 = vld [vmem:[%s263 + $0x180] sm:$0xff]
        %v876 = vld [vmem:[%s263 + $0x188] sm:$0xff]
        %v877 = vld [vmem:[%s263 + $0x190] sm:$0xff]
        %v878 = vld [vmem:[%s263 + $0x198] sm:$0xff]
        %v879 = vld [vmem:[%s263 + $0x1a0] sm:$0xff]
        %v880 = vld [vmem:[%s263 + $0x1a8] sm:$0xff]
        %v881 = vld [vmem:[%s263 + $0x1b0] sm:$0xff]
        %v882 = vld [vmem:[%s263 + $0x1b8] sm:$0xff]
        %v883 = vld [vmem:[%s263 + $0x1c0] sm:$0xff]
        %v884 = vld [vmem:[%s263 + $0x1c8] sm:$0xff]
        %v885 = vld [vmem:[%s263 + $0x1d0] sm:$0xff]
        %v886 = vld [vmem:[%s263 + $0x1d8] sm:$0xff]
        %v887 = vld [vmem:[%s263 + $0x1e0] sm:$0xff]
        %v888 = vld [vmem:[%s263 + $0x1e8] sm:$0xff]
        %v889 = vld [vmem:[%s263 + $0x1f0] sm:$0xff]
        %v890 = vld [vmem:[%s263 + $0x1f8] sm:$0xff]
        %v891 = vld [vmem:[%s263 + $0x200] sm:$0xff]
        %v892 = vld [vmem:[%s263 + $0x208] sm:$0xff]
        %v893 = vld [vmem:[%s263 + $0x210] sm:$0xff]
        %v894 = vld [vmem:[%s263 + $0x218] sm:$0xff]
        %v895 = vld [vmem:[%s263 + $0x220] sm:$0xff]
        %v896 = vld [vmem:[%s263 + $0x228] sm:$0xff]
        %v897 = vld [vmem:[%s263 + $0x230] sm:$0xff]
        %v898 = vld [vmem:[%s263 + $0x238] sm:$0xff]
        %v899 = vld [vmem:[%s263 + $0x240] sm:$0xff]
        %v900 = vld [vmem:[%s263 + $0x248] sm:$0xff]
        %v901 = vld [vmem:[%s263 + $0x250] sm:$0xff]
        %v902 = vld [vmem:[%s263 + $0x258] sm:$0xff]
        %v903 = vld [vmem:[%s263 + $0x260] sm:$0xff]
        %v904 = vld [vmem:[%s263 + $0x268] sm:$0xff]
        %v905 = vld [vmem:[%s263 + $0x270] sm:$0xff]
        %v906 = vld [vmem:[%s263 + $0x278] sm:$0xff]
        %v907 = vld [vmem:[%s263 + $0x280] sm:$0xff]
        %v908 = vld [vmem:[%s263 + $0x288] sm:$0xff]
        %v909 = vld [vmem:[%s263 + $0x290] sm:$0xff]
        %v910 = vld [vmem:[%s263 + $0x298] sm:$0xff]
        %v911 = vld [vmem:[%s263 + $0x2a0] sm:$0xff]
        %v912 = vld [vmem:[%s263 + $0x2a8] sm:$0xff]
        %v913 = vld [vmem:[%s263 + $0x2b0] sm:$0xff]
        %v914 = vld [vmem:[%s263 + $0x2b8] sm:$0xff]
        %v915 = vld [vmem:[%s263 + $0x2c0] sm:$0xff]
        %v916 = vld [vmem:[%s263 + $0x2c8] sm:$0xff]
        %v917 = vld [vmem:[%s263 + $0x2d0] sm:$0xff]
        %v918 = vld [vmem:[%s263 + $0x2d8] sm:$0xff]
        %v919 = vld [vmem:[%s263 + $0x2e0] sm:$0xff]
        %v920 = vld [vmem:[%s263 + $0x2e8] sm:$0xff]
        %v921 = vld [vmem:[%s263 + $0x2f0] sm:$0xff]
        %v922 = vld [vmem:[%s263 + $0x2f8] sm:$0xff]
        %v923 = vld [vmem:[%s263 + $0x300] sm:$0xff]
        %v924 = vld [vmem:[%s263 + $0x308] sm:$0xff]
        %v925 = vld [vmem:[%s263 + $0x310] sm:$0xff]
        %v926 = vld [vmem:[%s263 + $0x318] sm:$0xff]
        %v927 = vld [vmem:[%s263 + $0x320] sm:$0xff]
        %v928 = vld [vmem:[%s263 + $0x328] sm:$0xff]
        %v929 = vld [vmem:[%s263 + $0x330] sm:$0xff]
        %v930 = vld [vmem:[%s263 + $0x338] sm:$0xff]
        %v931 = vld [vmem:[%s263 + $0x340] sm:$0xff]
        %v932 = vld [vmem:[%s263 + $0x348] sm:$0xff]
        %v933 = vld [vmem:[%s263 + $0x350] sm:$0xff]
        %v934 = vld [vmem:[%s263 + $0x358] sm:$0xff]
        %v935 = vld [vmem:[%s263 + $0x360] sm:$0xff]
        %v936 = vld [vmem:[%s263 + $0x368] sm:$0xff]
        %v937 = vld [vmem:[%s263 + $0x370] sm:$0xff]
        %v938 = vld [vmem:[%s263 + $0x378] sm:$0xff]
        %v939 = vld [vmem:[%s263 + $0x380] sm:$0xff]
        %v940 = vld [vmem:[%s263 + $0x388] sm:$0xff]
        %v941 = vld [vmem:[%s263 + $0x390] sm:$0xff]
        %v942 = vld [vmem:[%s263 + $0x398] sm:$0xff]
        %v943 = vld [vmem:[%s263 + $0x3a0] sm:$0xff]
        %v944 = vld [vmem:[%s263 + $0x3a8] sm:$0xff]
        %v945 = vld [vmem:[%s263 + $0x3b0] sm:$0xff]
        %v946 = vld [vmem:[%s263 + $0x3b8] sm:$0xff]
        %v947 = vld [vmem:[%s263 + $0x3c0] sm:$0xff]
        %v948 = vld [vmem:[%s263 + $0x3c8] sm:$0xff]
        %v949 = vld [vmem:[%s263 + $0x3d0] sm:$0xff]
        %v950 = vld [vmem:[%s263 + $0x3d8] sm:$0xff]
        %v951 = vld [vmem:[%s263 + $0x3e0] sm:$0xff]
        %v952 = vld [vmem:[%s263 + $0x3e8] sm:$0xff]
        %v953 = vld [vmem:[%s263 + $0x3f0] sm:$0xff]
        %v954 = vld [vmem:[%s263 + $0x3f8] sm:$0xff]
        %v955 = vld [vmem:[%s263 + $0x400] sm:$0xff]
        %v956 = vld [vmem:[%s263 + $0x408] sm:$0xff]
        %v957 = vld [vmem:[%s263 + $0x410] sm:$0xff]
        %v958 = vld [vmem:[%s263 + $0x418] sm:$0xff]
        %v959 = vld [vmem:[%s263 + $0x420] sm:$0xff]
        %v960 = vld [vmem:[%s263 + $0x428] sm:$0xff]
        %v961 = vld [vmem:[%s263 + $0x430] sm:$0xff]
        %v962 = vld [vmem:[%s263 + $0x438] sm:$0xff]
        %v963 = vld [vmem:[%s263 + $0x440] sm:$0xff]
        %v964 = vld [vmem:[%s263 + $0x448] sm:$0xff]
        %v965 = vld [vmem:[%s263 + $0x450] sm:$0xff]
        %v966 = vld [vmem:[%s263 + $0x458] sm:$0xff]
        %v967 = vld [vmem:[%s263 + $0x460] sm:$0xff]
        %v968 = vld [vmem:[%s263 + $0x468] sm:$0xff]
        %v969 = vld [vmem:[%s263 + $0x470] sm:$0xff]
        %v970 = vld [vmem:[%s263 + $0x478] sm:$0xff]
        %v971 = vld [vmem:[%s263 + $0x480] sm:$0xff]
        %v972 = vld [vmem:[%s263 + $0x488] sm:$0xff]
        %v973 = vld [vmem:[%s263 + $0x490] sm:$0xff]
        %v974 = vld [vmem:[%s263 + $0x498] sm:$0xff]
        %v975 = vld [vmem:[%s263 + $0x4a0] sm:$0xff]
        %v976 = vld [vmem:[%s263 + $0x4a8] sm:$0xff]
        %v977 = vld [vmem:[%s263 + $0x4b0] sm:$0xff]
        %v978 = vld [vmem:[%s263 + $0x4b8] sm:$0xff]
        %v979 = vld [vmem:[%s263 + $0x4c0] sm:$0xff]
        %v980 = vld [vmem:[%s263 + $0x4c8] sm:$0xff]
        %v981 = vld [vmem:[%s263 + $0x4d0] sm:$0xff]
        %v982 = vld [vmem:[%s263 + $0x4d8] sm:$0xff]
        %v983 = vld [vmem:[%s263 + $0x4e0] sm:$0xff]
        %v984 = vld [vmem:[%s263 + $0x4e8] sm:$0xff]
        %v985 = vld [vmem:[%s263 + $0x4f0] sm:$0xff]
        %v986 = vld [vmem:[%s263 + $0x4f8] sm:$0xff]
        %v987 = vld [vmem:[%s263 + $0x500] sm:$0xff]
        %v988 = vld [vmem:[%s263 + $0x508] sm:$0xff]
        %v989 = vld [vmem:[%s263 + $0x510] sm:$0xff]
        %v990 = vld [vmem:[%s263 + $0x518] sm:$0xff]
        %v991 = vld [vmem:[%s263 + $0x520] sm:$0xff]
        %v992 = vld [vmem:[%s263 + $0x528] sm:$0xff]
        %v993 = vld [vmem:[%s263 + $0x530] sm:$0xff]
        %v994 = vld [vmem:[%s263 + $0x538] sm:$0xff]
        %v995 = vld [vmem:[%s263 + $0x540] sm:$0xff]
        %v996 = vld [vmem:[%s263 + $0x548] sm:$0xff]
        %v997 = vld [vmem:[%s263 + $0x550] sm:$0xff]
        %v998 = vld [vmem:[%s263 + $0x558] sm:$0xff]
        %v999 = vld [vmem:[%s263 + $0x560] sm:$0xff]
        %v1000 = vld [vmem:[%s263 + $0x568] sm:$0xff]
        %v1001 = vld [vmem:[%s263 + $0x570] sm:$0xff]
        %v1002 = vld [vmem:[%s263 + $0x578] sm:$0xff]
        %v1003 = vld [vmem:[%s263 + $0x580] sm:$0xff]
        %v1004 = vld [vmem:[%s263 + $0x588] sm:$0xff]
        %v1005 = vld [vmem:[%s263 + $0x590] sm:$0xff]
        %v1006 = vld [vmem:[%s263 + $0x598] sm:$0xff]
        %v1007 = vld [vmem:[%s263 + $0x5a0] sm:$0xff]
        %v1008 = vld [vmem:[%s263 + $0x5a8] sm:$0xff]
        %v1009 = vld [vmem:[%s263 + $0x5b0] sm:$0xff]
        %v1010 = vld [vmem:[%s263 + $0x5b8] sm:$0xff]
        %v1011 = vld [vmem:[%s263 + $0x5c0] sm:$0xff]
        %v1012 = vld [vmem:[%s263 + $0x5c8] sm:$0xff]
        %v1013 = vld [vmem:[%s263 + $0x5d0] sm:$0xff]
        %v1014 = vld [vmem:[%s263 + $0x5d8] sm:$0xff]
        %v1015 = vld [vmem:[%s263 + $0x5e0] sm:$0xff]
        %v1016 = vld [vmem:[%s263 + $0x5e8] sm:$0xff]
        %v1017 = vld [vmem:[%s263 + $0x5f0] sm:$0xff]
        %v1018 = vld [vmem:[%s263 + $0x5f8] sm:$0xff]
        %v1019 = vld [vmem:[%s263 + $0x600] sm:$0xff]
        %v1020 = vld [vmem:[%s263 + $0x608] sm:$0xff]
        %v1021 = vld [vmem:[%s263 + $0x610] sm:$0xff]
        %v1022 = vld [vmem:[%s263 + $0x618] sm:$0xff]
        %v1023 = vld [vmem:[%s263 + $0x620] sm:$0xff]
        %v1024 = vld [vmem:[%s263 + $0x628] sm:$0xff]
        %v1025 = vld [vmem:[%s263 + $0x630] sm:$0xff]
        %v1026 = vld [vmem:[%s263 + $0x638] sm:$0xff]
        %v1027 = vld [vmem:[%s263 + $0x640] sm:$0xff]
        %v1028 = vld [vmem:[%s263 + $0x648] sm:$0xff]
        %v1029 = vld [vmem:[%s263 + $0x650] sm:$0xff]
        %v1030 = vld [vmem:[%s263 + $0x658] sm:$0xff]
        %v1031 = vld [vmem:[%s263 + $0x660] sm:$0xff]
        %v1032 = vld [vmem:[%s263 + $0x668] sm:$0xff]
        %v1033 = vld [vmem:[%s263 + $0x670] sm:$0xff]
        %v1034 = vld [vmem:[%s263 + $0x678] sm:$0xff]
        %v1035 = vld [vmem:[%s263 + $0x680] sm:$0xff]
        %v1036 = vld [vmem:[%s263 + $0x688] sm:$0xff]
        %v1037 = vld [vmem:[%s263 + $0x690] sm:$0xff]
        %v1038 = vld [vmem:[%s263 + $0x698] sm:$0xff]
        %v1039 = vld [vmem:[%s263 + $0x6a0] sm:$0xff]
        %v1040 = vld [vmem:[%s263 + $0x6a8] sm:$0xff]
        %v1041 = vld [vmem:[%s263 + $0x6b0] sm:$0xff]
        %v1042 = vld [vmem:[%s263 + $0x6b8] sm:$0xff]
        %v1043 = vld [vmem:[%s263 + $0x6c0] sm:$0xff]
        %v1044 = vld [vmem:[%s263 + $0x6c8] sm:$0xff]
        %v1045 = vld [vmem:[%s263 + $0x6d0] sm:$0xff]
        %v1046 = vld [vmem:[%s263 + $0x6d8] sm:$0xff]
        %v1047 = vld [vmem:[%s263 + $0x6e0] sm:$0xff]
        %v1048 = vld [vmem:[%s263 + $0x6e8] sm:$0xff]
        %v1049 = vld [vmem:[%s263 + $0x6f0] sm:$0xff]
        %v1050 = vld [vmem:[%s263 + $0x6f8] sm:$0xff]
        %v1051 = vld [vmem:[%s263 + $0x700] sm:$0xff]
        %v1052 = vld [vmem:[%s263 + $0x708] sm:$0xff]
        %v1053 = vld [vmem:[%s263 + $0x710] sm:$0xff]
        %v1054 = vld [vmem:[%s263 + $0x718] sm:$0xff]
        %v1055 = vld [vmem:[%s263 + $0x720] sm:$0xff]
        %v1056 = vld [vmem:[%s263 + $0x728] sm:$0xff]
        %v1057 = vld [vmem:[%s263 + $0x730] sm:$0xff]
        %v1058 = vld [vmem:[%s263 + $0x738] sm:$0xff]
        %v1059 = vld [vmem:[%s263 + $0x740] sm:$0xff]
        %v1060 = vld [vmem:[%s263 + $0x748] sm:$0xff]
        %v1061 = vld [vmem:[%s263 + $0x750] sm:$0xff]
        %v1062 = vld [vmem:[%s263 + $0x758] sm:$0xff]
        %v1063 = vld [vmem:[%s263 + $0x760] sm:$0xff]
        %v1064 = vld [vmem:[%s263 + $0x768] sm:$0xff]
        %v1065 = vld [vmem:[%s263 + $0x770] sm:$0xff]
        %v1066 = vld [vmem:[%s263 + $0x778] sm:$0xff]
        %v1067 = vld [vmem:[%s263 + $0x780] sm:$0xff]
        %v1068 = vld [vmem:[%s263 + $0x788] sm:$0xff]
        %v1069 = vld [vmem:[%s263 + $0x790] sm:$0xff]
        %v1070 = vld [vmem:[%s263 + $0x798] sm:$0xff]
        %v1071 = vld [vmem:[%s263 + $0x7a0] sm:$0xff]
        %v1072 = vld [vmem:[%s263 + $0x7a8] sm:$0xff]
        %v1073 = vld [vmem:[%s263 + $0x7b0] sm:$0xff]
        %v1074 = vld [vmem:[%s263 + $0x7b8] sm:$0xff]
        %v1075 = vld [vmem:[%s263 + $0x7c0] sm:$0xff]
        %v1076 = vld [vmem:[%s263 + $0x7c8] sm:$0xff]
        %v1077 = vld [vmem:[%s263 + $0x7d0] sm:$0xff]
        %v1078 = vld [vmem:[%s263 + $0x7d8] sm:$0xff]
        %v1079 = vld [vmem:[%s263 + $0x7e0] sm:$0xff]
        %v1080 = vld [vmem:[%s263 + $0x7e8] sm:$0xff]
        %v1081 = vld [vmem:[%s263 + $0x7f0] sm:$0xff]
        %v1082 = vld [vmem:[%s263 + $0x7f8] sm:$0xff]
        %v1083 = vstv %s826
        %v1084 = vmul.f32 %v1083, %v827
        %v1085 = vmul.f32 %v1083, %v828
        %v1086 = vmul.f32 %v1083, %v829
        %v1087 = vmul.f32 %v1083, %v830
        %v1088 = vmul.f32 %v1083, %v831
        %v1089 = vmul.f32 %v1083, %v832
        %v1090 = vmul.f32 %v1083, %v833
        %v1091 = vmul.f32 %v1083, %v834
        %v1092 = vmul.f32 %v1083, %v835
        %v1093 = vmul.f32 %v1083, %v836
        %v1094 = vmul.f32 %v1083, %v837
        %v1095 = vmul.f32 %v1083, %v838
        %v1096 = vmul.f32 %v1083, %v839
        %v1097 = vmul.f32 %v1083, %v840
        %v1098 = vmul.f32 %v1083, %v841
        %v1099 = vmul.f32 %v1083, %v842
        %v1100 = vmul.f32 %v1083, %v843
        %v1101 = vmul.f32 %v1083, %v844
        %v1102 = vmul.f32 %v1083, %v845
        %v1103 = vmul.f32 %v1083, %v846
        %v1104 = vmul.f32 %v1083, %v847
        %v1105 = vmul.f32 %v1083, %v848
        %v1106 = vmul.f32 %v1083, %v849
        %v1107 = vmul.f32 %v1083, %v850
        %v1108 = vmul.f32 %v1083, %v851
        %v1109 = vmul.f32 %v1083, %v852
        %v1110 = vmul.f32 %v1083, %v853
        %v1111 = vmul.f32 %v1083, %v854
        %v1112 = vmul.f32 %v1083, %v855
        %v1113 = vmul.f32 %v1083, %v856
        %v1114 = vmul.f32 %v1083, %v857
        %v1115 = vmul.f32 %v1083, %v858
        %v1116 = vmul.f32 %v1083, %v859
        %v1117 = vmul.f32 %v1083, %v860
        %v1118 = vmul.f32 %v1083, %v861
        %v1119 = vmul.f32 %v1083, %v862
        %v1120 = vmul.f32 %v1083, %v863
        %v1121 = vmul.f32 %v1083, %v864
        %v1122 = vmul.f32 %v1083, %v865
        %v1123 = vmul.f32 %v1083, %v866
        %v1124 = vmul.f32 %v1083, %v867
        %v1125 = vmul.f32 %v1083, %v868
        %v1126 = vmul.f32 %v1083, %v869
        %v1127 = vmul.f32 %v1083, %v870
        %v1128 = vmul.f32 %v1083, %v871
        %v1129 = vmul.f32 %v1083, %v872
        %v1130 = vmul.f32 %v1083, %v873
        %v1131 = vmul.f32 %v1083, %v874
        %v1132 = vmul.f32 %v1083, %v875
        %v1133 = vmul.f32 %v1083, %v876
        %v1134 = vmul.f32 %v1083, %v877
        %v1135 = vmul.f32 %v1083, %v878
        %v1136 = vmul.f32 %v1083, %v879
        %v1137 = vmul.f32 %v1083, %v880
        %v1138 = vmul.f32 %v1083, %v881
        %v1139 = vmul.f32 %v1083, %v882
        %v1140 = vmul.f32 %v1083, %v883
        %v1141 = vmul.f32 %v1083, %v884
        %v1142 = vmul.f32 %v1083, %v885
        %v1143 = vmul.f32 %v1083, %v886
        %v1144 = vmul.f32 %v1083, %v887
        %v1145 = vmul.f32 %v1083, %v888
        %v1146 = vmul.f32 %v1083, %v889
        %v1147 = vmul.f32 %v1083, %v890
        %v1148 = vmul.f32 %v1083, %v891
        %v1149 = vmul.f32 %v1083, %v892
        %v1150 = vmul.f32 %v1083, %v893
        %v1151 = vmul.f32 %v1083, %v894
        %v1152 = vmul.f32 %v1083, %v895
        %v1153 = vmul.f32 %v1083, %v896
        %v1154 = vmul.f32 %v1083, %v897
        %v1155 = vmul.f32 %v1083, %v898
        %v1156 = vmul.f32 %v1083, %v899
        %v1157 = vmul.f32 %v1083, %v900
        %v1158 = vmul.f32 %v1083, %v901
        %v1159 = vmul.f32 %v1083, %v902
        %v1160 = vmul.f32 %v1083, %v903
        %v1161 = vmul.f32 %v1083, %v904
        %v1162 = vmul.f32 %v1083, %v905
        %v1163 = vmul.f32 %v1083, %v906
        %v1164 = vmul.f32 %v1083, %v907
        %v1165 = vmul.f32 %v1083, %v908
        %v1166 = vmul.f32 %v1083, %v909
        %v1167 = vmul.f32 %v1083, %v910
        %v1168 = vmul.f32 %v1083, %v911
        %v1169 = vmul.f32 %v1083, %v912
        %v1170 = vmul.f32 %v1083, %v913
        %v1171 = vmul.f32 %v1083, %v914
        %v1172 = vmul.f32 %v1083, %v915
        %v1173 = vmul.f32 %v1083, %v916
        %v1174 = vmul.f32 %v1083, %v917
        %v1175 = vmul.f32 %v1083, %v918
        %v1176 = vmul.f32 %v1083, %v919
        %v1177 = vmul.f32 %v1083, %v920
        %v1178 = vmul.f32 %v1083, %v921
        %v1179 = vmul.f32 %v1083, %v922
        %v1180 = vmul.f32 %v1083, %v923
        %v1181 = vmul.f32 %v1083, %v924
        %v1182 = vmul.f32 %v1083, %v925
        %v1183 = vmul.f32 %v1083, %v926
        %v1184 = vmul.f32 %v1083, %v927
        %v1185 = vmul.f32 %v1083, %v928
        %v1186 = vmul.f32 %v1083, %v929
        %v1187 = vmul.f32 %v1083, %v930
        %v1188 = vmul.f32 %v1083, %v931
        %v1189 = vmul.f32 %v1083, %v932
        %v1190 = vmul.f32 %v1083, %v933
        %v1191 = vmul.f32 %v1083, %v934
        %v1192 = vmul.f32 %v1083, %v935
        %v1193 = vmul.f32 %v1083, %v936
        %v1194 = vmul.f32 %v1083, %v937
        %v1195 = vmul.f32 %v1083, %v938
        %v1196 = vmul.f32 %v1083, %v939
        %v1197 = vmul.f32 %v1083, %v940
        %v1198 = vmul.f32 %v1083, %v941
        %v1199 = vmul.f32 %v1083, %v942
        %v1200 = vmul.f32 %v1083, %v943
        %v1201 = vmul.f32 %v1083, %v944
        %v1202 = vmul.f32 %v1083, %v945
        %v1203 = vmul.f32 %v1083, %v946
        %v1204 = vmul.f32 %v1083, %v947
        %v1205 = vmul.f32 %v1083, %v948
        %v1206 = vmul.f32 %v1083, %v949
        %v1207 = vmul.f32 %v1083, %v950
        %v1208 = vmul.f32 %v1083, %v951
        %v1209 = vmul.f32 %v1083, %v952
        %v1210 = vmul.f32 %v1083, %v953
        %v1211 = vmul.f32 %v1083, %v954
        %v1212 = vmul.f32 %v1083, %v955
        %v1213 = vmul.f32 %v1083, %v956
        %v1214 = vmul.f32 %v1083, %v957
        %v1215 = vmul.f32 %v1083, %v958
        %v1216 = vmul.f32 %v1083, %v959
        %v1217 = vmul.f32 %v1083, %v960
        %v1218 = vmul.f32 %v1083, %v961
        %v1219 = vmul.f32 %v1083, %v962
        %v1220 = vmul.f32 %v1083, %v963
        %v1221 = vmul.f32 %v1083, %v964
        %v1222 = vmul.f32 %v1083, %v965
        %v1223 = vmul.f32 %v1083, %v966
        %v1224 = vmul.f32 %v1083, %v967
        %v1225 = vmul.f32 %v1083, %v968
        %v1226 = vmul.f32 %v1083, %v969
        %v1227 = vmul.f32 %v1083, %v970
        %v1228 = vmul.f32 %v1083, %v971
        %v1229 = vmul.f32 %v1083, %v972
        %v1230 = vmul.f32 %v1083, %v973
        %v1231 = vmul.f32 %v1083, %v974
        %v1232 = vmul.f32 %v1083, %v975
        %v1233 = vmul.f32 %v1083, %v976
        %v1234 = vmul.f32 %v1083, %v977
        %v1235 = vmul.f32 %v1083, %v978
        %v1236 = vmul.f32 %v1083, %v979
        %v1237 = vmul.f32 %v1083, %v980
        %v1238 = vmul.f32 %v1083, %v981
        %v1239 = vmul.f32 %v1083, %v982
        %v1240 = vmul.f32 %v1083, %v983
        %v1241 = vmul.f32 %v1083, %v984
        %v1242 = vmul.f32 %v1083, %v985
        %v1243 = vmul.f32 %v1083, %v986
        %v1244 = vmul.f32 %v1083, %v987
        %v1245 = vmul.f32 %v1083, %v988
        %v1246 = vmul.f32 %v1083, %v989
        %v1247 = vmul.f32 %v1083, %v990
        %v1248 = vmul.f32 %v1083, %v991
        %v1249 = vmul.f32 %v1083, %v992
        %v1250 = vmul.f32 %v1083, %v993
        %v1251 = vmul.f32 %v1083, %v994
        %v1252 = vmul.f32 %v1083, %v995
        %v1253 = vmul.f32 %v1083, %v996
        %v1254 = vmul.f32 %v1083, %v997
        %v1255 = vmul.f32 %v1083, %v998
        %v1256 = vmul.f32 %v1083, %v999
        %v1257 = vmul.f32 %v1083, %v1000
        %v1258 = vmul.f32 %v1083, %v1001
        %v1259 = vmul.f32 %v1083, %v1002
        %v1260 = vmul.f32 %v1083, %v1003
        %v1261 = vmul.f32 %v1083, %v1004
        %v1262 = vmul.f32 %v1083, %v1005
        %v1263 = vmul.f32 %v1083, %v1006
        %v1264 = vmul.f32 %v1083, %v1007
        %v1265 = vmul.f32 %v1083, %v1008
        %v1266 = vmul.f32 %v1083, %v1009
        %v1267 = vmul.f32 %v1083, %v1010
        %v1268 = vmul.f32 %v1083, %v1011
        %v1269 = vmul.f32 %v1083, %v1012
        %v1270 = vmul.f32 %v1083, %v1013
        %v1271 = vmul.f32 %v1083, %v1014
        %v1272 = vmul.f32 %v1083, %v1015
        %v1273 = vmul.f32 %v1083, %v1016
        %v1274 = vmul.f32 %v1083, %v1017
        %v1275 = vmul.f32 %v1083, %v1018
        %v1276 = vmul.f32 %v1083, %v1019
        %v1277 = vmul.f32 %v1083, %v1020
        %v1278 = vmul.f32 %v1083, %v1021
        %v1279 = vmul.f32 %v1083, %v1022
        %v1280 = vmul.f32 %v1083, %v1023
        %v1281 = vmul.f32 %v1083, %v1024
        %v1282 = vmul.f32 %v1083, %v1025
        %v1283 = vmul.f32 %v1083, %v1026
        %v1284 = vmul.f32 %v1083, %v1027
        %v1285 = vmul.f32 %v1083, %v1028
        %v1286 = vmul.f32 %v1083, %v1029
        %v1287 = vmul.f32 %v1083, %v1030
        %v1288 = vmul.f32 %v1083, %v1031
        %v1289 = vmul.f32 %v1083, %v1032
        %v1290 = vmul.f32 %v1083, %v1033
        %v1291 = vmul.f32 %v1083, %v1034
        %v1292 = vmul.f32 %v1083, %v1035
        %v1293 = vmul.f32 %v1083, %v1036
        %v1294 = vmul.f32 %v1083, %v1037
        %v1295 = vmul.f32 %v1083, %v1038
        %v1296 = vmul.f32 %v1083, %v1039
        %v1297 = vmul.f32 %v1083, %v1040
        %v1298 = vmul.f32 %v1083, %v1041
        %v1299 = vmul.f32 %v1083, %v1042
        %v1300 = vmul.f32 %v1083, %v1043
        %v1301 = vmul.f32 %v1083, %v1044
        %v1302 = vmul.f32 %v1083, %v1045
        %v1303 = vmul.f32 %v1083, %v1046
        %v1304 = vmul.f32 %v1083, %v1047
        %v1305 = vmul.f32 %v1083, %v1048
        %v1306 = vmul.f32 %v1083, %v1049
        %v1307 = vmul.f32 %v1083, %v1050
        %v1308 = vmul.f32 %v1083, %v1051
        %v1309 = vmul.f32 %v1083, %v1052
        %v1310 = vmul.f32 %v1083, %v1053
        %v1311 = vmul.f32 %v1083, %v1054
        %v1312 = vmul.f32 %v1083, %v1055
        %v1313 = vmul.f32 %v1083, %v1056
        %v1314 = vmul.f32 %v1083, %v1057
        %v1315 = vmul.f32 %v1083, %v1058
        %v1316 = vmul.f32 %v1083, %v1059
        %v1317 = vmul.f32 %v1083, %v1060
        %v1318 = vmul.f32 %v1083, %v1061
        %v1319 = vmul.f32 %v1083, %v1062
        %v1320 = vmul.f32 %v1083, %v1063
        %v1321 = vmul.f32 %v1083, %v1064
        %v1322 = vmul.f32 %v1083, %v1065
        %v1323 = vmul.f32 %v1083, %v1066
        %v1324 = vmul.f32 %v1083, %v1067
        %v1325 = vmul.f32 %v1083, %v1068
        %v1326 = vmul.f32 %v1083, %v1069
        %v1327 = vmul.f32 %v1083, %v1070
        %v1328 = vmul.f32 %v1083, %v1071
        %v1329 = vmul.f32 %v1083, %v1072
        %v1330 = vmul.f32 %v1083, %v1073
        %v1331 = vmul.f32 %v1083, %v1074
        %v1332 = vmul.f32 %v1083, %v1075
        %v1333 = vmul.f32 %v1083, %v1076
        %v1334 = vmul.f32 %v1083, %v1077
        %v1335 = vmul.f32 %v1083, %v1078
        %v1336 = vmul.f32 %v1083, %v1079
        %v1337 = vmul.f32 %v1083, %v1080
        %v1338 = vmul.f32 %v1083, %v1081
        %v1339 = vmul.f32 %v1083, %v1082
        %v1340 = vadd.f32 %v570, %v1084
        %v1341 = vadd.f32 %v571, %v1085
        %v1342 = vadd.f32 %v572, %v1086
        %v1343 = vadd.f32 %v573, %v1087
        %v1344 = vadd.f32 %v574, %v1088
        %v1345 = vadd.f32 %v575, %v1089
        %v1346 = vadd.f32 %v576, %v1090
        %v1347 = vadd.f32 %v577, %v1091
        %v1348 = vadd.f32 %v578, %v1092
        %v1349 = vadd.f32 %v579, %v1093
        %v1350 = vadd.f32 %v580, %v1094
        %v1351 = vadd.f32 %v581, %v1095
        %v1352 = vadd.f32 %v582, %v1096
        %v1353 = vadd.f32 %v583, %v1097
        %v1354 = vadd.f32 %v584, %v1098
        %v1355 = vadd.f32 %v585, %v1099
        %v1356 = vadd.f32 %v586, %v1100
        %v1357 = vadd.f32 %v587, %v1101
        %v1358 = vadd.f32 %v588, %v1102
        %v1359 = vadd.f32 %v589, %v1103
        %v1360 = vadd.f32 %v590, %v1104
        %v1361 = vadd.f32 %v591, %v1105
        %v1362 = vadd.f32 %v592, %v1106
        %v1363 = vadd.f32 %v593, %v1107
        %v1364 = vadd.f32 %v594, %v1108
        %v1365 = vadd.f32 %v595, %v1109
        %v1366 = vadd.f32 %v596, %v1110
        %v1367 = vadd.f32 %v597, %v1111
        %v1368 = vadd.f32 %v598, %v1112
        %v1369 = vadd.f32 %v599, %v1113
        %v1370 = vadd.f32 %v600, %v1114
        %v1371 = vadd.f32 %v601, %v1115
        %v1372 = vadd.f32 %v602, %v1116
        %v1373 = vadd.f32 %v603, %v1117
        %v1374 = vadd.f32 %v604, %v1118
        %v1375 = vadd.f32 %v605, %v1119
        %v1376 = vadd.f32 %v606, %v1120
        %v1377 = vadd.f32 %v607, %v1121
        %v1378 = vadd.f32 %v608, %v1122
        %v1379 = vadd.f32 %v609, %v1123
        %v1380 = vadd.f32 %v610, %v1124
        %v1381 = vadd.f32 %v611, %v1125
        %v1382 = vadd.f32 %v612, %v1126
        %v1383 = vadd.f32 %v613, %v1127
        %v1384 = vadd.f32 %v614, %v1128
        %v1385 = vadd.f32 %v615, %v1129
        %v1386 = vadd.f32 %v616, %v1130
        %v1387 = vadd.f32 %v617, %v1131
        %v1388 = vadd.f32 %v618, %v1132
        %v1389 = vadd.f32 %v619, %v1133
        %v1390 = vadd.f32 %v620, %v1134
        %v1391 = vadd.f32 %v621, %v1135
        %v1392 = vadd.f32 %v622, %v1136
        %v1393 = vadd.f32 %v623, %v1137
        %v1394 = vadd.f32 %v624, %v1138
        %v1395 = vadd.f32 %v625, %v1139
        %v1396 = vadd.f32 %v626, %v1140
        %v1397 = vadd.f32 %v627, %v1141
        %v1398 = vadd.f32 %v628, %v1142
        %v1399 = vadd.f32 %v629, %v1143
        %v1400 = vadd.f32 %v630, %v1144
        %v1401 = vadd.f32 %v631, %v1145
        %v1402 = vadd.f32 %v632, %v1146
        %v1403 = vadd.f32 %v633, %v1147
        %v1404 = vadd.f32 %v634, %v1148
        %v1405 = vadd.f32 %v635, %v1149
        %v1406 = vadd.f32 %v636, %v1150
        %v1407 = vadd.f32 %v637, %v1151
        %v1408 = vadd.f32 %v638, %v1152
        %v1409 = vadd.f32 %v639, %v1153
        %v1410 = vadd.f32 %v640, %v1154
        %v1411 = vadd.f32 %v641, %v1155
        %v1412 = vadd.f32 %v642, %v1156
        %v1413 = vadd.f32 %v643, %v1157
        %v1414 = vadd.f32 %v644, %v1158
        %v1415 = vadd.f32 %v645, %v1159
        %v1416 = vadd.f32 %v646, %v1160
        %v1417 = vadd.f32 %v647, %v1161
        %v1418 = vadd.f32 %v648, %v1162
        %v1419 = vadd.f32 %v649, %v1163
        %v1420 = vadd.f32 %v650, %v1164
        %v1421 = vadd.f32 %v651, %v1165
        %v1422 = vadd.f32 %v652, %v1166
        %v1423 = vadd.f32 %v653, %v1167
        %v1424 = vadd.f32 %v654, %v1168
        %v1425 = vadd.f32 %v655, %v1169
        %v1426 = vadd.f32 %v656, %v1170
        %v1427 = vadd.f32 %v657, %v1171
        %v1428 = vadd.f32 %v658, %v1172
        %v1429 = vadd.f32 %v659, %v1173
        %v1430 = vadd.f32 %v660, %v1174
        %v1431 = vadd.f32 %v661, %v1175
        %v1432 = vadd.f32 %v662, %v1176
        %v1433 = vadd.f32 %v663, %v1177
        %v1434 = vadd.f32 %v664, %v1178
        %v1435 = vadd.f32 %v665, %v1179
        %v1436 = vadd.f32 %v666, %v1180
        %v1437 = vadd.f32 %v667, %v1181
        %v1438 = vadd.f32 %v668, %v1182
        %v1439 = vadd.f32 %v669, %v1183
        %v1440 = vadd.f32 %v670, %v1184
        %v1441 = vadd.f32 %v671, %v1185
        %v1442 = vadd.f32 %v672, %v1186
        %v1443 = vadd.f32 %v673, %v1187
        %v1444 = vadd.f32 %v674, %v1188
        %v1445 = vadd.f32 %v675, %v1189
        %v1446 = vadd.f32 %v676, %v1190
        %v1447 = vadd.f32 %v677, %v1191
        %v1448 = vadd.f32 %v678, %v1192
        %v1449 = vadd.f32 %v679, %v1193
        %v1450 = vadd.f32 %v680, %v1194
        %v1451 = vadd.f32 %v681, %v1195
        %v1452 = vadd.f32 %v682, %v1196
        %v1453 = vadd.f32 %v683, %v1197
        %v1454 = vadd.f32 %v684, %v1198
        %v1455 = vadd.f32 %v685, %v1199
        %v1456 = vadd.f32 %v686, %v1200
        %v1457 = vadd.f32 %v687, %v1201
        %v1458 = vadd.f32 %v688, %v1202
        %v1459 = vadd.f32 %v689, %v1203
        %v1460 = vadd.f32 %v690, %v1204
        %v1461 = vadd.f32 %v691, %v1205
        %v1462 = vadd.f32 %v692, %v1206
        %v1463 = vadd.f32 %v693, %v1207
        %v1464 = vadd.f32 %v694, %v1208
        %v1465 = vadd.f32 %v695, %v1209
        %v1466 = vadd.f32 %v696, %v1210
        %v1467 = vadd.f32 %v697, %v1211
        %v1468 = vadd.f32 %v698, %v1212
        %v1469 = vadd.f32 %v699, %v1213
        %v1470 = vadd.f32 %v700, %v1214
        %v1471 = vadd.f32 %v701, %v1215
        %v1472 = vadd.f32 %v702, %v1216
        %v1473 = vadd.f32 %v703, %v1217
        %v1474 = vadd.f32 %v704, %v1218
        %v1475 = vadd.f32 %v705, %v1219
        %v1476 = vadd.f32 %v706, %v1220
        %v1477 = vadd.f32 %v707, %v1221
        %v1478 = vadd.f32 %v708, %v1222
        %v1479 = vadd.f32 %v709, %v1223
        %v1480 = vadd.f32 %v710, %v1224
        %v1481 = vadd.f32 %v711, %v1225
        %v1482 = vadd.f32 %v712, %v1226
        %v1483 = vadd.f32 %v713, %v1227
        %v1484 = vadd.f32 %v714, %v1228
        %v1485 = vadd.f32 %v715, %v1229
        %v1486 = vadd.f32 %v716, %v1230
        %v1487 = vadd.f32 %v717, %v1231
        %v1488 = vadd.f32 %v718, %v1232
        %v1489 = vadd.f32 %v719, %v1233
        %v1490 = vadd.f32 %v720, %v1234
        %v1491 = vadd.f32 %v721, %v1235
        %v1492 = vadd.f32 %v722, %v1236
        %v1493 = vadd.f32 %v723, %v1237
        %v1494 = vadd.f32 %v724, %v1238
        %v1495 = vadd.f32 %v725, %v1239
        %v1496 = vadd.f32 %v726, %v1240
        %v1497 = vadd.f32 %v727, %v1241
        %v1498 = vadd.f32 %v728, %v1242
        %v1499 = vadd.f32 %v729, %v1243
        %v1500 = vadd.f32 %v730, %v1244
        %v1501 = vadd.f32 %v731, %v1245
        %v1502 = vadd.f32 %v732, %v1246
        %v1503 = vadd.f32 %v733, %v1247
        %v1504 = vadd.f32 %v734, %v1248
        %v1505 = vadd.f32 %v735, %v1249
        %v1506 = vadd.f32 %v736, %v1250
        %v1507 = vadd.f32 %v737, %v1251
        %v1508 = vadd.f32 %v738, %v1252
        %v1509 = vadd.f32 %v739, %v1253
        %v1510 = vadd.f32 %v740, %v1254
        %v1511 = vadd.f32 %v741, %v1255
        %v1512 = vadd.f32 %v742, %v1256
        %v1513 = vadd.f32 %v743, %v1257
        %v1514 = vadd.f32 %v744, %v1258
        %v1515 = vadd.f32 %v745, %v1259
        %v1516 = vadd.f32 %v746, %v1260
        %v1517 = vadd.f32 %v747, %v1261
        %v1518 = vadd.f32 %v748, %v1262
        %v1519 = vadd.f32 %v749, %v1263
        %v1520 = vadd.f32 %v750, %v1264
        %v1521 = vadd.f32 %v751, %v1265
        %v1522 = vadd.f32 %v752, %v1266
        %v1523 = vadd.f32 %v753, %v1267
        %v1524 = vadd.f32 %v754, %v1268
        %v1525 = vadd.f32 %v755, %v1269
        %v1526 = vadd.f32 %v756, %v1270
        %v1527 = vadd.f32 %v757, %v1271
        %v1528 = vadd.f32 %v758, %v1272
        %v1529 = vadd.f32 %v759, %v1273
        %v1530 = vadd.f32 %v760, %v1274
        %v1531 = vadd.f32 %v761, %v1275
        %v1532 = vadd.f32 %v762, %v1276
        %v1533 = vadd.f32 %v763, %v1277
        %v1534 = vadd.f32 %v764, %v1278
        %v1535 = vadd.f32 %v765, %v1279
        %v1536 = vadd.f32 %v766, %v1280
        %v1537 = vadd.f32 %v767, %v1281
        %v1538 = vadd.f32 %v768, %v1282
        %v1539 = vadd.f32 %v769, %v1283
        %v1540 = vadd.f32 %v770, %v1284
        %v1541 = vadd.f32 %v771, %v1285
        %v1542 = vadd.f32 %v772, %v1286
        %v1543 = vadd.f32 %v773, %v1287
        %v1544 = vadd.f32 %v774, %v1288
        %v1545 = vadd.f32 %v775, %v1289
        %v1546 = vadd.f32 %v776, %v1290
        %v1547 = vadd.f32 %v777, %v1291
        %v1548 = vadd.f32 %v778, %v1292
        %v1549 = vadd.f32 %v779, %v1293
        %v1550 = vadd.f32 %v780, %v1294
        %v1551 = vadd.f32 %v781, %v1295
        %v1552 = vadd.f32 %v782, %v1296
        %v1553 = vadd.f32 %v783, %v1297
        %v1554 = vadd.f32 %v784, %v1298
        %v1555 = vadd.f32 %v785, %v1299
        %v1556 = vadd.f32 %v786, %v1300
        %v1557 = vadd.f32 %v787, %v1301
        %v1558 = vadd.f32 %v788, %v1302
        %v1559 = vadd.f32 %v789, %v1303
        %v1560 = vadd.f32 %v790, %v1304
        %v1561 = vadd.f32 %v791, %v1305
        %v1562 = vadd.f32 %v792, %v1306
        %v1563 = vadd.f32 %v793, %v1307
        %v1564 = vadd.f32 %v794, %v1308
        %v1565 = vadd.f32 %v795, %v1309
        %v1566 = vadd.f32 %v796, %v1310
        %v1567 = vadd.f32 %v797, %v1311
        %v1568 = vadd.f32 %v798, %v1312
        %v1569 = vadd.f32 %v799, %v1313
        %v1570 = vadd.f32 %v800, %v1314
        %v1571 = vadd.f32 %v801, %v1315
        %v1572 = vadd.f32 %v802, %v1316
        %v1573 = vadd.f32 %v803, %v1317
        %v1574 = vadd.f32 %v804, %v1318
        %v1575 = vadd.f32 %v805, %v1319
        %v1576 = vadd.f32 %v806, %v1320
        %v1577 = vadd.f32 %v807, %v1321
        %v1578 = vadd.f32 %v808, %v1322
        %v1579 = vadd.f32 %v809, %v1323
        %v1580 = vadd.f32 %v810, %v1324
        %v1581 = vadd.f32 %v811, %v1325
        %v1582 = vadd.f32 %v812, %v1326
        %v1583 = vadd.f32 %v813, %v1327
        %v1584 = vadd.f32 %v814, %v1328
        %v1585 = vadd.f32 %v815, %v1329
        %v1586 = vadd.f32 %v816, %v1330
        %v1587 = vadd.f32 %v817, %v1331
        %v1588 = vadd.f32 %v818, %v1332
        %v1589 = vadd.f32 %v819, %v1333
        %v1590 = vadd.f32 %v820, %v1334
        %v1591 = vadd.f32 %v821, %v1335
        %v1592 = vadd.f32 %v822, %v1336
        %v1593 = vadd.f32 %v823, %v1337
        %v1594 = vadd.f32 %v824, %v1338
        %v1595 = vadd.f32 %v825, %v1339
        %s1596 = sld [smem:[#allocation2 + $0x2]]
        %v1597 = vld [vmem:[%s272] sm:$0xff]
        %v1598 = vld [vmem:[%s272 + $0x8] sm:$0xff]
        %v1599 = vld [vmem:[%s272 + $0x10] sm:$0xff]
        %v1600 = vld [vmem:[%s272 + $0x18] sm:$0xff]
        %v1601 = vld [vmem:[%s272 + $0x20] sm:$0xff]
        %v1602 = vld [vmem:[%s272 + $0x28] sm:$0xff]
        %v1603 = vld [vmem:[%s272 + $0x30] sm:$0xff]
        %v1604 = vld [vmem:[%s272 + $0x38] sm:$0xff]
        %v1605 = vld [vmem:[%s272 + $0x40] sm:$0xff]
        %v1606 = vld [vmem:[%s272 + $0x48] sm:$0xff]
        %v1607 = vld [vmem:[%s272 + $0x50] sm:$0xff]
        %v1608 = vld [vmem:[%s272 + $0x58] sm:$0xff]
        %v1609 = vld [vmem:[%s272 + $0x60] sm:$0xff]
        %v1610 = vld [vmem:[%s272 + $0x68] sm:$0xff]
        %v1611 = vld [vmem:[%s272 + $0x70] sm:$0xff]
        %v1612 = vld [vmem:[%s272 + $0x78] sm:$0xff]
        %v1613 = vld [vmem:[%s272 + $0x80] sm:$0xff]
        %v1614 = vld [vmem:[%s272 + $0x88] sm:$0xff]
        %v1615 = vld [vmem:[%s272 + $0x90] sm:$0xff]
        %v1616 = vld [vmem:[%s272 + $0x98] sm:$0xff]
        %v1617 = vld [vmem:[%s272 + $0xa0] sm:$0xff]
        %v1618 = vld [vmem:[%s272 + $0xa8] sm:$0xff]
        %v1619 = vld [vmem:[%s272 + $0xb0] sm:$0xff]
        %v1620 = vld [vmem:[%s272 + $0xb8] sm:$0xff]
        %v1621 = vld [vmem:[%s272 + $0xc0] sm:$0xff]
        %v1622 = vld [vmem:[%s272 + $0xc8] sm:$0xff]
        %v1623 = vld [vmem:[%s272 + $0xd0] sm:$0xff]
        %v1624 = vld [vmem:[%s272 + $0xd8] sm:$0xff]
        %v1625 = vld [vmem:[%s272 + $0xe0] sm:$0xff]
        %v1626 = vld [vmem:[%s272 + $0xe8] sm:$0xff]
        %v1627 = vld [vmem:[%s272 + $0xf0] sm:$0xff]
        %v1628 = vld [vmem:[%s272 + $0xf8] sm:$0xff]
        %v1629 = vld [vmem:[%s272 + $0x100] sm:$0xff]
        %v1630 = vld [vmem:[%s272 + $0x108] sm:$0xff]
        %v1631 = vld [vmem:[%s272 + $0x110] sm:$0xff]
        %v1632 = vld [vmem:[%s272 + $0x118] sm:$0xff]
        %v1633 = vld [vmem:[%s272 + $0x120] sm:$0xff]
        %v1634 = vld [vmem:[%s272 + $0x128] sm:$0xff]
        %v1635 = vld [vmem:[%s272 + $0x130] sm:$0xff]
        %v1636 = vld [vmem:[%s272 + $0x138] sm:$0xff]
        %v1637 = vld [vmem:[%s272 + $0x140] sm:$0xff]
        %v1638 = vld [vmem:[%s272 + $0x148] sm:$0xff]
        %v1639 = vld [vmem:[%s272 + $0x150] sm:$0xff]
        %v1640 = vld [vmem:[%s272 + $0x158] sm:$0xff]
        %v1641 = vld [vmem:[%s272 + $0x160] sm:$0xff]
        %v1642 = vld [vmem:[%s272 + $0x168] sm:$0xff]
        %v1643 = vld [vmem:[%s272 + $0x170] sm:$0xff]
        %v1644 = vld [vmem:[%s272 + $0x178] sm:$0xff]
        %v1645 = vld [vmem:[%s272 + $0x180] sm:$0xff]
        %v1646 = vld [vmem:[%s272 + $0x188] sm:$0xff]
        %v1647 = vld [vmem:[%s272 + $0x190] sm:$0xff]
        %v1648 = vld [vmem:[%s272 + $0x198] sm:$0xff]
        %v1649 = vld [vmem:[%s272 + $0x1a0] sm:$0xff]
        %v1650 = vld [vmem:[%s272 + $0x1a8] sm:$0xff]
        %v1651 = vld [vmem:[%s272 + $0x1b0] sm:$0xff]
        %v1652 = vld [vmem:[%s272 + $0x1b8] sm:$0xff]
        %v1653 = vld [vmem:[%s272 + $0x1c0] sm:$0xff]
        %v1654 = vld [vmem:[%s272 + $0x1c8] sm:$0xff]
        %v1655 = vld [vmem:[%s272 + $0x1d0] sm:$0xff]
        %v1656 = vld [vmem:[%s272 + $0x1d8] sm:$0xff]
        %v1657 = vld [vmem:[%s272 + $0x1e0] sm:$0xff]
        %v1658 = vld [vmem:[%s272 + $0x1e8] sm:$0xff]
        %v1659 = vld [vmem:[%s272 + $0x1f0] sm:$0xff]
        %v1660 = vld [vmem:[%s272 + $0x1f8] sm:$0xff]
        %v1661 = vld [vmem:[%s272 + $0x200] sm:$0xff]
        %v1662 = vld [vmem:[%s272 + $0x208] sm:$0xff]
        %v1663 = vld [vmem:[%s272 + $0x210] sm:$0xff]
        %v1664 = vld [vmem:[%s272 + $0x218] sm:$0xff]
        %v1665 = vld [vmem:[%s272 + $0x220] sm:$0xff]
        %v1666 = vld [vmem:[%s272 + $0x228] sm:$0xff]
        %v1667 = vld [vmem:[%s272 + $0x230] sm:$0xff]
        %v1668 = vld [vmem:[%s272 + $0x238] sm:$0xff]
        %v1669 = vld [vmem:[%s272 + $0x240] sm:$0xff]
        %v1670 = vld [vmem:[%s272 + $0x248] sm:$0xff]
        %v1671 = vld [vmem:[%s272 + $0x250] sm:$0xff]
        %v1672 = vld [vmem:[%s272 + $0x258] sm:$0xff]
        %v1673 = vld [vmem:[%s272 + $0x260] sm:$0xff]
        %v1674 = vld [vmem:[%s272 + $0x268] sm:$0xff]
        %v1675 = vld [vmem:[%s272 + $0x270] sm:$0xff]
        %v1676 = vld [vmem:[%s272 + $0x278] sm:$0xff]
        %v1677 = vld [vmem:[%s272 + $0x280] sm:$0xff]
        %v1678 = vld [vmem:[%s272 + $0x288] sm:$0xff]
        %v1679 = vld [vmem:[%s272 + $0x290] sm:$0xff]
        %v1680 = vld [vmem:[%s272 + $0x298] sm:$0xff]
        %v1681 = vld [vmem:[%s272 + $0x2a0] sm:$0xff]
        %v1682 = vld [vmem:[%s272 + $0x2a8] sm:$0xff]
        %v1683 = vld [vmem:[%s272 + $0x2b0] sm:$0xff]
        %v1684 = vld [vmem:[%s272 + $0x2b8] sm:$0xff]
        %v1685 = vld [vmem:[%s272 + $0x2c0] sm:$0xff]
        %v1686 = vld [vmem:[%s272 + $0x2c8] sm:$0xff]
        %v1687 = vld [vmem:[%s272 + $0x2d0] sm:$0xff]
        %v1688 = vld [vmem:[%s272 + $0x2d8] sm:$0xff]
        %v1689 = vld [vmem:[%s272 + $0x2e0] sm:$0xff]
        %v1690 = vld [vmem:[%s272 + $0x2e8] sm:$0xff]
        %v1691 = vld [vmem:[%s272 + $0x2f0] sm:$0xff]
        %v1692 = vld [vmem:[%s272 + $0x2f8] sm:$0xff]
        %v1693 = vld [vmem:[%s272 + $0x300] sm:$0xff]
        %v1694 = vld [vmem:[%s272 + $0x308] sm:$0xff]
        %v1695 = vld [vmem:[%s272 + $0x310] sm:$0xff]
        %v1696 = vld [vmem:[%s272 + $0x318] sm:$0xff]
        %v1697 = vld [vmem:[%s272 + $0x320] sm:$0xff]
        %v1698 = vld [vmem:[%s272 + $0x328] sm:$0xff]
        %v1699 = vld [vmem:[%s272 + $0x330] sm:$0xff]
        %v1700 = vld [vmem:[%s272 + $0x338] sm:$0xff]
        %v1701 = vld [vmem:[%s272 + $0x340] sm:$0xff]
        %v1702 = vld [vmem:[%s272 + $0x348] sm:$0xff]
        %v1703 = vld [vmem:[%s272 + $0x350] sm:$0xff]
        %v1704 = vld [vmem:[%s272 + $0x358] sm:$0xff]
        %v1705 = vld [vmem:[%s272 + $0x360] sm:$0xff]
        %v1706 = vld [vmem:[%s272 + $0x368] sm:$0xff]
        %v1707 = vld [vmem:[%s272 + $0x370] sm:$0xff]
        %v1708 = vld [vmem:[%s272 + $0x378] sm:$0xff]
        %v1709 = vld [vmem:[%s272 + $0x380] sm:$0xff]
        %v1710 = vld [vmem:[%s272 + $0x388] sm:$0xff]
        %v1711 = vld [vmem:[%s272 + $0x390] sm:$0xff]
        %v1712 = vld [vmem:[%s272 + $0x398] sm:$0xff]
        %v1713 = vld [vmem:[%s272 + $0x3a0] sm:$0xff]
        %v1714 = vld [vmem:[%s272 + $0x3a8] sm:$0xff]
        %v1715 = vld [vmem:[%s272 + $0x3b0] sm:$0xff]
        %v1716 = vld [vmem:[%s272 + $0x3b8] sm:$0xff]
        %v1717 = vld [vmem:[%s272 + $0x3c0] sm:$0xff]
        %v1718 = vld [vmem:[%s272 + $0x3c8] sm:$0xff]
        %v1719 = vld [vmem:[%s272 + $0x3d0] sm:$0xff]
        %v1720 = vld [vmem:[%s272 + $0x3d8] sm:$0xff]
        %v1721 = vld [vmem:[%s272 + $0x3e0] sm:$0xff]
        %v1722 = vld [vmem:[%s272 + $0x3e8] sm:$0xff]
        %v1723 = vld [vmem:[%s272 + $0x3f0] sm:$0xff]
        %v1724 = vld [vmem:[%s272 + $0x3f8] sm:$0xff]
        %v1725 = vld [vmem:[%s272 + $0x400] sm:$0xff]
        %v1726 = vld [vmem:[%s272 + $0x408] sm:$0xff]
        %v1727 = vld [vmem:[%s272 + $0x410] sm:$0xff]
        %v1728 = vld [vmem:[%s272 + $0x418] sm:$0xff]
        %v1729 = vld [vmem:[%s272 + $0x420] sm:$0xff]
        %v1730 = vld [vmem:[%s272 + $0x428] sm:$0xff]
        %v1731 = vld [vmem:[%s272 + $0x430] sm:$0xff]
        %v1732 = vld [vmem:[%s272 + $0x438] sm:$0xff]
        %v1733 = vld [vmem:[%s272 + $0x440] sm:$0xff]
        %v1734 = vld [vmem:[%s272 + $0x448] sm:$0xff]
        %v1735 = vld [vmem:[%s272 + $0x450] sm:$0xff]
        %v1736 = vld [vmem:[%s272 + $0x458] sm:$0xff]
        %v1737 = vld [vmem:[%s272 + $0x460] sm:$0xff]
        %v1738 = vld [vmem:[%s272 + $0x468] sm:$0xff]
        %v1739 = vld [vmem:[%s272 + $0x470] sm:$0xff]
        %v1740 = vld [vmem:[%s272 + $0x478] sm:$0xff]
        %v1741 = vld [vmem:[%s272 + $0x480] sm:$0xff]
        %v1742 = vld [vmem:[%s272 + $0x488] sm:$0xff]
        %v1743 = vld [vmem:[%s272 + $0x490] sm:$0xff]
        %v1744 = vld [vmem:[%s272 + $0x498] sm:$0xff]
        %v1745 = vld [vmem:[%s272 + $0x4a0] sm:$0xff]
        %v1746 = vld [vmem:[%s272 + $0x4a8] sm:$0xff]
        %v1747 = vld [vmem:[%s272 + $0x4b0] sm:$0xff]
        %v1748 = vld [vmem:[%s272 + $0x4b8] sm:$0xff]
        %v1749 = vld [vmem:[%s272 + $0x4c0] sm:$0xff]
        %v1750 = vld [vmem:[%s272 + $0x4c8] sm:$0xff]
        %v1751 = vld [vmem:[%s272 + $0x4d0] sm:$0xff]
        %v1752 = vld [vmem:[%s272 + $0x4d8] sm:$0xff]
        %v1753 = vld [vmem:[%s272 + $0x4e0] sm:$0xff]
        %v1754 = vld [vmem:[%s272 + $0x4e8] sm:$0xff]
        %v1755 = vld [vmem:[%s272 + $0x4f0] sm:$0xff]
        %v1756 = vld [vmem:[%s272 + $0x4f8] sm:$0xff]
        %v1757 = vld [vmem:[%s272 + $0x500] sm:$0xff]
        %v1758 = vld [vmem:[%s272 + $0x508] sm:$0xff]
        %v1759 = vld [vmem:[%s272 + $0x510] sm:$0xff]
        %v1760 = vld [vmem:[%s272 + $0x518] sm:$0xff]
        %v1761 = vld [vmem:[%s272 + $0x520] sm:$0xff]
        %v1762 = vld [vmem:[%s272 + $0x528] sm:$0xff]
        %v1763 = vld [vmem:[%s272 + $0x530] sm:$0xff]
        %v1764 = vld [vmem:[%s272 + $0x538] sm:$0xff]
        %v1765 = vld [vmem:[%s272 + $0x540] sm:$0xff]
        %v1766 = vld [vmem:[%s272 + $0x548] sm:$0xff]
        %v1767 = vld [vmem:[%s272 + $0x550] sm:$0xff]
        %v1768 = vld [vmem:[%s272 + $0x558] sm:$0xff]
        %v1769 = vld [vmem:[%s272 + $0x560] sm:$0xff]
        %v1770 = vld [vmem:[%s272 + $0x568] sm:$0xff]
        %v1771 = vld [vmem:[%s272 + $0x570] sm:$0xff]
        %v1772 = vld [vmem:[%s272 + $0x578] sm:$0xff]
        %v1773 = vld [vmem:[%s272 + $0x580] sm:$0xff]
        %v1774 = vld [vmem:[%s272 + $0x588] sm:$0xff]
        %v1775 = vld [vmem:[%s272 + $0x590] sm:$0xff]
        %v1776 = vld [vmem:[%s272 + $0x598] sm:$0xff]
        %v1777 = vld [vmem:[%s272 + $0x5a0] sm:$0xff]
        %v1778 = vld [vmem:[%s272 + $0x5a8] sm:$0xff]
        %v1779 = vld [vmem:[%s272 + $0x5b0] sm:$0xff]
        %v1780 = vld [vmem:[%s272 + $0x5b8] sm:$0xff]
        %v1781 = vld [vmem:[%s272 + $0x5c0] sm:$0xff]
        %v1782 = vld [vmem:[%s272 + $0x5c8] sm:$0xff]
        %v1783 = vld [vmem:[%s272 + $0x5d0] sm:$0xff]
        %v1784 = vld [vmem:[%s272 + $0x5d8] sm:$0xff]
        %v1785 = vld [vmem:[%s272 + $0x5e0] sm:$0xff]
        %v1786 = vld [vmem:[%s272 + $0x5e8] sm:$0xff]
        %v1787 = vld [vmem:[%s272 + $0x5f0] sm:$0xff]
        %v1788 = vld [vmem:[%s272 + $0x5f8] sm:$0xff]
        %v1789 = vld [vmem:[%s272 + $0x600] sm:$0xff]
        %v1790 = vld [vmem:[%s272 + $0x608] sm:$0xff]
        %v1791 = vld [vmem:[%s272 + $0x610] sm:$0xff]
        %v1792 = vld [vmem:[%s272 + $0x618] sm:$0xff]
        %v1793 = vld [vmem:[%s272 + $0x620] sm:$0xff]
        %v1794 = vld [vmem:[%s272 + $0x628] sm:$0xff]
        %v1795 = vld [vmem:[%s272 + $0x630] sm:$0xff]
        %v1796 = vld [vmem:[%s272 + $0x638] sm:$0xff]
        %v1797 = vld [vmem:[%s272 + $0x640] sm:$0xff]
        %v1798 = vld [vmem:[%s272 + $0x648] sm:$0xff]
        %v1799 = vld [vmem:[%s272 + $0x650] sm:$0xff]
        %v1800 = vld [vmem:[%s272 + $0x658] sm:$0xff]
        %v1801 = vld [vmem:[%s272 + $0x660] sm:$0xff]
        %v1802 = vld [vmem:[%s272 + $0x668] sm:$0xff]
        %v1803 = vld [vmem:[%s272 + $0x670] sm:$0xff]
        %v1804 = vld [vmem:[%s272 + $0x678] sm:$0xff]
        %v1805 = vld [vmem:[%s272 + $0x680] sm:$0xff]
        %v1806 = vld [vmem:[%s272 + $0x688] sm:$0xff]
        %v1807 = vld [vmem:[%s272 + $0x690] sm:$0xff]
        %v1808 = vld [vmem:[%s272 + $0x698] sm:$0xff]
        %v1809 = vld [vmem:[%s272 + $0x6a0] sm:$0xff]
        %v1810 = vld [vmem:[%s272 + $0x6a8] sm:$0xff]
        %v1811 = vld [vmem:[%s272 + $0x6b0] sm:$0xff]
        %v1812 = vld [vmem:[%s272 + $0x6b8] sm:$0xff]
        %v1813 = vld [vmem:[%s272 + $0x6c0] sm:$0xff]
        %v1814 = vld [vmem:[%s272 + $0x6c8] sm:$0xff]
        %v1815 = vld [vmem:[%s272 + $0x6d0] sm:$0xff]
        %v1816 = vld [vmem:[%s272 + $0x6d8] sm:$0xff]
        %v1817 = vld [vmem:[%s272 + $0x6e0] sm:$0xff]
        %v1818 = vld [vmem:[%s272 + $0x6e8] sm:$0xff]
        %v1819 = vld [vmem:[%s272 + $0x6f0] sm:$0xff]
        %v1820 = vld [vmem:[%s272 + $0x6f8] sm:$0xff]
        %v1821 = vld [vmem:[%s272 + $0x700] sm:$0xff]
        %v1822 = vld [vmem:[%s272 + $0x708] sm:$0xff]
        %v1823 = vld [vmem:[%s272 + $0x710] sm:$0xff]
        %v1824 = vld [vmem:[%s272 + $0x718] sm:$0xff]
        %v1825 = vld [vmem:[%s272 + $0x720] sm:$0xff]
        %v1826 = vld [vmem:[%s272 + $0x728] sm:$0xff]
        %v1827 = vld [vmem:[%s272 + $0x730] sm:$0xff]
        %v1828 = vld [vmem:[%s272 + $0x738] sm:$0xff]
        %v1829 = vld [vmem:[%s272 + $0x740] sm:$0xff]
        %v1830 = vld [vmem:[%s272 + $0x748] sm:$0xff]
        %v1831 = vld [vmem:[%s272 + $0x750] sm:$0xff]
        %v1832 = vld [vmem:[%s272 + $0x758] sm:$0xff]
        %v1833 = vld [vmem:[%s272 + $0x760] sm:$0xff]
        %v1834 = vld [vmem:[%s272 + $0x768] sm:$0xff]
        %v1835 = vld [vmem:[%s272 + $0x770] sm:$0xff]
        %v1836 = vld [vmem:[%s272 + $0x778] sm:$0xff]
        %v1837 = vld [vmem:[%s272 + $0x780] sm:$0xff]
        %v1838 = vld [vmem:[%s272 + $0x788] sm:$0xff]
        %v1839 = vld [vmem:[%s272 + $0x790] sm:$0xff]
        %v1840 = vld [vmem:[%s272 + $0x798] sm:$0xff]
        %v1841 = vld [vmem:[%s272 + $0x7a0] sm:$0xff]
        %v1842 = vld [vmem:[%s272 + $0x7a8] sm:$0xff]
        %v1843 = vld [vmem:[%s272 + $0x7b0] sm:$0xff]
        %v1844 = vld [vmem:[%s272 + $0x7b8] sm:$0xff]
        %v1845 = vld [vmem:[%s272 + $0x7c0] sm:$0xff]
        %v1846 = vld [vmem:[%s272 + $0x7c8] sm:$0xff]
        %v1847 = vld [vmem:[%s272 + $0x7d0] sm:$0xff]
        %v1848 = vld [vmem:[%s272 + $0x7d8] sm:$0xff]
        %v1849 = vld [vmem:[%s272 + $0x7e0] sm:$0xff]
        %v1850 = vld [vmem:[%s272 + $0x7e8] sm:$0xff]
        %v1851 = vld [vmem:[%s272 + $0x7f0] sm:$0xff]
        %v1852 = vld [vmem:[%s272 + $0x7f8] sm:$0xff]
        %v1853 = vstv %s1596
        %v1854 = vmul.f32 %v1853, %v1597
        %v1855 = vmul.f32 %v1853, %v1598
        %v1856 = vmul.f32 %v1853, %v1599
        %v1857 = vmul.f32 %v1853, %v1600
        %v1858 = vmul.f32 %v1853, %v1601
        %v1859 = vmul.f32 %v1853, %v1602
        %v1860 = vmul.f32 %v1853, %v1603
        %v1861 = vmul.f32 %v1853, %v1604
        %v1862 = vmul.f32 %v1853, %v1605
        %v1863 = vmul.f32 %v1853, %v1606
        %v1864 = vmul.f32 %v1853, %v1607
        %v1865 = vmul.f32 %v1853, %v1608
        %v1866 = vmul.f32 %v1853, %v1609
        %v1867 = vmul.f32 %v1853, %v1610
        %v1868 = vmul.f32 %v1853, %v1611
        %v1869 = vmul.f32 %v1853, %v1612
        %v1870 = vmul.f32 %v1853, %v1613
        %v1871 = vmul.f32 %v1853, %v1614
        %v1872 = vmul.f32 %v1853, %v1615
        %v1873 = vmul.f32 %v1853, %v1616
        %v1874 = vmul.f32 %v1853, %v1617
        %v1875 = vmul.f32 %v1853, %v1618
        %v1876 = vmul.f32 %v1853, %v1619
        %v1877 = vmul.f32 %v1853, %v1620
        %v1878 = vmul.f32 %v1853, %v1621
        %v1879 = vmul.f32 %v1853, %v1622
        %v1880 = vmul.f32 %v1853, %v1623
        %v1881 = vmul.f32 %v1853, %v1624
        %v1882 = vmul.f32 %v1853, %v1625
        %v1883 = vmul.f32 %v1853, %v1626
        %v1884 = vmul.f32 %v1853, %v1627
        %v1885 = vmul.f32 %v1853, %v1628
        %v1886 = vmul.f32 %v1853, %v1629
        %v1887 = vmul.f32 %v1853, %v1630
        %v1888 = vmul.f32 %v1853, %v1631
        %v1889 = vmul.f32 %v1853, %v1632
        %v1890 = vmul.f32 %v1853, %v1633
        %v1891 = vmul.f32 %v1853, %v1634
        %v1892 = vmul.f32 %v1853, %v1635
        %v1893 = vmul.f32 %v1853, %v1636
        %v1894 = vmul.f32 %v1853, %v1637
        %v1895 = vmul.f32 %v1853, %v1638
        %v1896 = vmul.f32 %v1853, %v1639
        %v1897 = vmul.f32 %v1853, %v1640
        %v1898 = vmul.f32 %v1853, %v1641
        %v1899 = vmul.f32 %v1853, %v1642
        %v1900 = vmul.f32 %v1853, %v1643
        %v1901 = vmul.f32 %v1853, %v1644
        %v1902 = vmul.f32 %v1853, %v1645
        %v1903 = vmul.f32 %v1853, %v1646
        %v1904 = vmul.f32 %v1853, %v1647
        %v1905 = vmul.f32 %v1853, %v1648
        %v1906 = vmul.f32 %v1853, %v1649
        %v1907 = vmul.f32 %v1853, %v1650
        %v1908 = vmul.f32 %v1853, %v1651
        %v1909 = vmul.f32 %v1853, %v1652
        %v1910 = vmul.f32 %v1853, %v1653
        %v1911 = vmul.f32 %v1853, %v1654
        %v1912 = vmul.f32 %v1853, %v1655
        %v1913 = vmul.f32 %v1853, %v1656
        %v1914 = vmul.f32 %v1853, %v1657
        %v1915 = vmul.f32 %v1853, %v1658
        %v1916 = vmul.f32 %v1853, %v1659
        %v1917 = vmul.f32 %v1853, %v1660
        %v1918 = vmul.f32 %v1853, %v1661
        %v1919 = vmul.f32 %v1853, %v1662
        %v1920 = vmul.f32 %v1853, %v1663
        %v1921 = vmul.f32 %v1853, %v1664
        %v1922 = vmul.f32 %v1853, %v1665
        %v1923 = vmul.f32 %v1853, %v1666
        %v1924 = vmul.f32 %v1853, %v1667
        %v1925 = vmul.f32 %v1853, %v1668
        %v1926 = vmul.f32 %v1853, %v1669
        %v1927 = vmul.f32 %v1853, %v1670
        %v1928 = vmul.f32 %v1853, %v1671
        %v1929 = vmul.f32 %v1853, %v1672
        %v1930 = vmul.f32 %v1853, %v1673
        %v1931 = vmul.f32 %v1853, %v1674
        %v1932 = vmul.f32 %v1853, %v1675
        %v1933 = vmul.f32 %v1853, %v1676
        %v1934 = vmul.f32 %v1853, %v1677
        %v1935 = vmul.f32 %v1853, %v1678
        %v1936 = vmul.f32 %v1853, %v1679
        %v1937 = vmul.f32 %v1853, %v1680
        %v1938 = vmul.f32 %v1853, %v1681
        %v1939 = vmul.f32 %v1853, %v1682
        %v1940 = vmul.f32 %v1853, %v1683
        %v1941 = vmul.f32 %v1853, %v1684
        %v1942 = vmul.f32 %v1853, %v1685
        %v1943 = vmul.f32 %v1853, %v1686
        %v1944 = vmul.f32 %v1853, %v1687
        %v1945 = vmul.f32 %v1853, %v1688
        %v1946 = vmul.f32 %v1853, %v1689
        %v1947 = vmul.f32 %v1853, %v1690
        %v1948 = vmul.f32 %v1853, %v1691
        %v1949 = vmul.f32 %v1853, %v1692
        %v1950 = vmul.f32 %v1853, %v1693
        %v1951 = vmul.f32 %v1853, %v1694
        %v1952 = vmul.f32 %v1853, %v1695
        %v1953 = vmul.f32 %v1853, %v1696
        %v1954 = vmul.f32 %v1853, %v1697
        %v1955 = vmul.f32 %v1853, %v1698
        %v1956 = vmul.f32 %v1853, %v1699
        %v1957 = vmul.f32 %v1853, %v1700
        %v1958 = vmul.f32 %v1853, %v1701
        %v1959 = vmul.f32 %v1853, %v1702
        %v1960 = vmul.f32 %v1853, %v1703
        %v1961 = vmul.f32 %v1853, %v1704
        %v1962 = vmul.f32 %v1853, %v1705
        %v1963 = vmul.f32 %v1853, %v1706
        %v1964 = vmul.f32 %v1853, %v1707
        %v1965 = vmul.f32 %v1853, %v1708
        %v1966 = vmul.f32 %v1853, %v1709
        %v1967 = vmul.f32 %v1853, %v1710
        %v1968 = vmul.f32 %v1853, %v1711
        %v1969 = vmul.f32 %v1853, %v1712
        %v1970 = vmul.f32 %v1853, %v1713
        %v1971 = vmul.f32 %v1853, %v1714
        %v1972 = vmul.f32 %v1853, %v1715
        %v1973 = vmul.f32 %v1853, %v1716
        %v1974 = vmul.f32 %v1853, %v1717
        %v1975 = vmul.f32 %v1853, %v1718
        %v1976 = vmul.f32 %v1853, %v1719
        %v1977 = vmul.f32 %v1853, %v1720
        %v1978 = vmul.f32 %v1853, %v1721
        %v1979 = vmul.f32 %v1853, %v1722
        %v1980 = vmul.f32 %v1853, %v1723
        %v1981 = vmul.f32 %v1853, %v1724
        %v1982 = vmul.f32 %v1853, %v1725
        %v1983 = vmul.f32 %v1853, %v1726
        %v1984 = vmul.f32 %v1853, %v1727
        %v1985 = vmul.f32 %v1853, %v1728
        %v1986 = vmul.f32 %v1853, %v1729
        %v1987 = vmul.f32 %v1853, %v1730
        %v1988 = vmul.f32 %v1853, %v1731
        %v1989 = vmul.f32 %v1853, %v1732
        %v1990 = vmul.f32 %v1853, %v1733
        %v1991 = vmul.f32 %v1853, %v1734
        %v1992 = vmul.f32 %v1853, %v1735
        %v1993 = vmul.f32 %v1853, %v1736
        %v1994 = vmul.f32 %v1853, %v1737
        %v1995 = vmul.f32 %v1853, %v1738
        %v1996 = vmul.f32 %v1853, %v1739
        %v1997 = vmul.f32 %v1853, %v1740
        %v1998 = vmul.f32 %v1853, %v1741
        %v1999 = vmul.f32 %v1853, %v1742
        %v2000 = vmul.f32 %v1853, %v1743
        %v2001 = vmul.f32 %v1853, %v1744
        %v2002 = vmul.f32 %v1853, %v1745
        %v2003 = vmul.f32 %v1853, %v1746
        %v2004 = vmul.f32 %v1853, %v1747
        %v2005 = vmul.f32 %v1853, %v1748
        %v2006 = vmul.f32 %v1853, %v1749
        %v2007 = vmul.f32 %v1853, %v1750
        %v2008 = vmul.f32 %v1853, %v1751
        %v2009 = vmul.f32 %v1853, %v1752
        %v2010 = vmul.f32 %v1853, %v1753
        %v2011 = vmul.f32 %v1853, %v1754
        %v2012 = vmul.f32 %v1853, %v1755
        %v2013 = vmul.f32 %v1853, %v1756
        %v2014 = vmul.f32 %v1853, %v1757
        %v2015 = vmul.f32 %v1853, %v1758
        %v2016 = vmul.f32 %v1853, %v1759
        %v2017 = vmul.f32 %v1853, %v1760
        %v2018 = vmul.f32 %v1853, %v1761
        %v2019 = vmul.f32 %v1853, %v1762
        %v2020 = vmul.f32 %v1853, %v1763
        %v2021 = vmul.f32 %v1853, %v1764
        %v2022 = vmul.f32 %v1853, %v1765
        %v2023 = vmul.f32 %v1853, %v1766
        %v2024 = vmul.f32 %v1853, %v1767
        %v2025 = vmul.f32 %v1853, %v1768
        %v2026 = vmul.f32 %v1853, %v1769
        %v2027 = vmul.f32 %v1853, %v1770
        %v2028 = vmul.f32 %v1853, %v1771
        %v2029 = vmul.f32 %v1853, %v1772
        %v2030 = vmul.f32 %v1853, %v1773
        %v2031 = vmul.f32 %v1853, %v1774
        %v2032 = vmul.f32 %v1853, %v1775
        %v2033 = vmul.f32 %v1853, %v1776
        %v2034 = vmul.f32 %v1853, %v1777
        %v2035 = vmul.f32 %v1853, %v1778
        %v2036 = vmul.f32 %v1853, %v1779
        %v2037 = vmul.f32 %v1853, %v1780
        %v2038 = vmul.f32 %v1853, %v1781
        %v2039 = vmul.f32 %v1853, %v1782
        %v2040 = vmul.f32 %v1853, %v1783
        %v2041 = vmul.f32 %v1853, %v1784
        %v2042 = vmul.f32 %v1853, %v1785
        %v2043 = vmul.f32 %v1853, %v1786
        %v2044 = vmul.f32 %v1853, %v1787
        %v2045 = vmul.f32 %v1853, %v1788
        %v2046 = vmul.f32 %v1853, %v1789
        %v2047 = vmul.f32 %v1853, %v1790
        %v2048 = vmul.f32 %v1853, %v1791
        %v2049 = vmul.f32 %v1853, %v1792
        %v2050 = vmul.f32 %v1853, %v1793
        %v2051 = vmul.f32 %v1853, %v1794
        %v2052 = vmul.f32 %v1853, %v1795
        %v2053 = vmul.f32 %v1853, %v1796
        %v2054 = vmul.f32 %v1853, %v1797
        %v2055 = vmul.f32 %v1853, %v1798
        %v2056 = vmul.f32 %v1853, %v1799
        %v2057 = vmul.f32 %v1853, %v1800
        %v2058 = vmul.f32 %v1853, %v1801
        %v2059 = vmul.f32 %v1853, %v1802
        %v2060 = vmul.f32 %v1853, %v1803
        %v2061 = vmul.f32 %v1853, %v1804
        %v2062 = vmul.f32 %v1853, %v1805
        %v2063 = vmul.f32 %v1853, %v1806
        %v2064 = vmul.f32 %v1853, %v1807
        %v2065 = vmul.f32 %v1853, %v1808
        %v2066 = vmul.f32 %v1853, %v1809
        %v2067 = vmul.f32 %v1853, %v1810
        %v2068 = vmul.f32 %v1853, %v1811
        %v2069 = vmul.f32 %v1853, %v1812
        %v2070 = vmul.f32 %v1853, %v1813
        %v2071 = vmul.f32 %v1853, %v1814
        %v2072 = vmul.f32 %v1853, %v1815
        %v2073 = vmul.f32 %v1853, %v1816
        %v2074 = vmul.f32 %v1853, %v1817
        %v2075 = vmul.f32 %v1853, %v1818
        %v2076 = vmul.f32 %v1853, %v1819
        %v2077 = vmul.f32 %v1853, %v1820
        %v2078 = vmul.f32 %v1853, %v1821
        %v2079 = vmul.f32 %v1853, %v1822
        %v2080 = vmul.f32 %v1853, %v1823
        %v2081 = vmul.f32 %v1853, %v1824
        %v2082 = vmul.f32 %v1853, %v1825
        %v2083 = vmul.f32 %v1853, %v1826
        %v2084 = vmul.f32 %v1853, %v1827
        %v2085 = vmul.f32 %v1853, %v1828
        %v2086 = vmul.f32 %v1853, %v1829
        %v2087 = vmul.f32 %v1853, %v1830
        %v2088 = vmul.f32 %v1853, %v1831
        %v2089 = vmul.f32 %v1853, %v1832
        %v2090 = vmul.f32 %v1853, %v1833
        %v2091 = vmul.f32 %v1853, %v1834
        %v2092 = vmul.f32 %v1853, %v1835
        %v2093 = vmul.f32 %v1853, %v1836
        %v2094 = vmul.f32 %v1853, %v1837
        %v2095 = vmul.f32 %v1853, %v1838
        %v2096 = vmul.f32 %v1853, %v1839
        %v2097 = vmul.f32 %v1853, %v1840
        %v2098 = vmul.f32 %v1853, %v1841
        %v2099 = vmul.f32 %v1853, %v1842
        %v2100 = vmul.f32 %v1853, %v1843
        %v2101 = vmul.f32 %v1853, %v1844
        %v2102 = vmul.f32 %v1853, %v1845
        %v2103 = vmul.f32 %v1853, %v1846
        %v2104 = vmul.f32 %v1853, %v1847
        %v2105 = vmul.f32 %v1853, %v1848
        %v2106 = vmul.f32 %v1853, %v1849
        %v2107 = vmul.f32 %v1853, %v1850
        %v2108 = vmul.f32 %v1853, %v1851
        %v2109 = vmul.f32 %v1853, %v1852
        %v2110 = vadd.f32 %v1340, %v1854
        %v2111 = vadd.f32 %v1341, %v1855
        %v2112 = vadd.f32 %v1342, %v1856
        %v2113 = vadd.f32 %v1343, %v1857
        %v2114 = vadd.f32 %v1344, %v1858
        %v2115 = vadd.f32 %v1345, %v1859
        %v2116 = vadd.f32 %v1346, %v1860
        %v2117 = vadd.f32 %v1347, %v1861
        %v2118 = vadd.f32 %v1348, %v1862
        %v2119 = vadd.f32 %v1349, %v1863
        %v2120 = vadd.f32 %v1350, %v1864
        %v2121 = vadd.f32 %v1351, %v1865
        %v2122 = vadd.f32 %v1352, %v1866
        %v2123 = vadd.f32 %v1353, %v1867
        %v2124 = vadd.f32 %v1354, %v1868
        %v2125 = vadd.f32 %v1355, %v1869
        %v2126 = vadd.f32 %v1356, %v1870
        %v2127 = vadd.f32 %v1357, %v1871
        %v2128 = vadd.f32 %v1358, %v1872
        %v2129 = vadd.f32 %v1359, %v1873
        %v2130 = vadd.f32 %v1360, %v1874
        %v2131 = vadd.f32 %v1361, %v1875
        %v2132 = vadd.f32 %v1362, %v1876
        %v2133 = vadd.f32 %v1363, %v1877
        %v2134 = vadd.f32 %v1364, %v1878
        %v2135 = vadd.f32 %v1365, %v1879
        %v2136 = vadd.f32 %v1366, %v1880
        %v2137 = vadd.f32 %v1367, %v1881
        %v2138 = vadd.f32 %v1368, %v1882
        %v2139 = vadd.f32 %v1369, %v1883
        %v2140 = vadd.f32 %v1370, %v1884
        %v2141 = vadd.f32 %v1371, %v1885
        %v2142 = vadd.f32 %v1372, %v1886
        %v2143 = vadd.f32 %v1373, %v1887
        %v2144 = vadd.f32 %v1374, %v1888
        %v2145 = vadd.f32 %v1375, %v1889
        %v2146 = vadd.f32 %v1376, %v1890
        %v2147 = vadd.f32 %v1377, %v1891
        %v2148 = vadd.f32 %v1378, %v1892
        %v2149 = vadd.f32 %v1379, %v1893
        %v2150 = vadd.f32 %v1380, %v1894
        %v2151 = vadd.f32 %v1381, %v1895
        %v2152 = vadd.f32 %v1382, %v1896
        %v2153 = vadd.f32 %v1383, %v1897
        %v2154 = vadd.f32 %v1384, %v1898
        %v2155 = vadd.f32 %v1385, %v1899
        %v2156 = vadd.f32 %v1386, %v1900
        %v2157 = vadd.f32 %v1387, %v1901
        %v2158 = vadd.f32 %v1388, %v1902
        %v2159 = vadd.f32 %v1389, %v1903
        %v2160 = vadd.f32 %v1390, %v1904
        %v2161 = vadd.f32 %v1391, %v1905
        %v2162 = vadd.f32 %v1392, %v1906
        %v2163 = vadd.f32 %v1393, %v1907
        %v2164 = vadd.f32 %v1394, %v1908
        %v2165 = vadd.f32 %v1395, %v1909
        %v2166 = vadd.f32 %v1396, %v1910
        %v2167 = vadd.f32 %v1397, %v1911
        %v2168 = vadd.f32 %v1398, %v1912
        %v2169 = vadd.f32 %v1399, %v1913
        %v2170 = vadd.f32 %v1400, %v1914
        %v2171 = vadd.f32 %v1401, %v1915
        %v2172 = vadd.f32 %v1402, %v1916
        %v2173 = vadd.f32 %v1403, %v1917
        %v2174 = vadd.f32 %v1404, %v1918
        %v2175 = vadd.f32 %v1405, %v1919
        %v2176 = vadd.f32 %v1406, %v1920
        %v2177 = vadd.f32 %v1407, %v1921
        %v2178 = vadd.f32 %v1408, %v1922
        %v2179 = vadd.f32 %v1409, %v1923
        %v2180 = vadd.f32 %v1410, %v1924
        %v2181 = vadd.f32 %v1411, %v1925
        %v2182 = vadd.f32 %v1412, %v1926
        %v2183 = vadd.f32 %v1413, %v1927
        %v2184 = vadd.f32 %v1414, %v1928
        %v2185 = vadd.f32 %v1415, %v1929
        %v2186 = vadd.f32 %v1416, %v1930
        %v2187 = vadd.f32 %v1417, %v1931
        %v2188 = vadd.f32 %v1418, %v1932
        %v2189 = vadd.f32 %v1419, %v1933
        %v2190 = vadd.f32 %v1420, %v1934
        %v2191 = vadd.f32 %v1421, %v1935
        %v2192 = vadd.f32 %v1422, %v1936
        %v2193 = vadd.f32 %v1423, %v1937
        %v2194 = vadd.f32 %v1424, %v1938
        %v2195 = vadd.f32 %v1425, %v1939
        %v2196 = vadd.f32 %v1426, %v1940
        %v2197 = vadd.f32 %v1427, %v1941
        %v2198 = vadd.f32 %v1428, %v1942
        %v2199 = vadd.f32 %v1429, %v1943
        %v2200 = vadd.f32 %v1430, %v1944
        %v2201 = vadd.f32 %v1431, %v1945
        %v2202 = vadd.f32 %v1432, %v1946
        %v2203 = vadd.f32 %v1433, %v1947
        %v2204 = vadd.f32 %v1434, %v1948
        %v2205 = vadd.f32 %v1435, %v1949
        %v2206 = vadd.f32 %v1436, %v1950
        %v2207 = vadd.f32 %v1437, %v1951
        %v2208 = vadd.f32 %v1438, %v1952
        %v2209 = vadd.f32 %v1439, %v1953
        %v2210 = vadd.f32 %v1440, %v1954
        %v2211 = vadd.f32 %v1441, %v1955
        %v2212 = vadd.f32 %v1442, %v1956
        %v2213 = vadd.f32 %v1443, %v1957
        %v2214 = vadd.f32 %v1444, %v1958
        %v2215 = vadd.f32 %v1445, %v1959
        %v2216 = vadd.f32 %v1446, %v1960
        %v2217 = vadd.f32 %v1447, %v1961
        %v2218 = vadd.f32 %v1448, %v1962
        %v2219 = vadd.f32 %v1449, %v1963
        %v2220 = vadd.f32 %v1450, %v1964
        %v2221 = vadd.f32 %v1451, %v1965
        %v2222 = vadd.f32 %v1452, %v1966
        %v2223 = vadd.f32 %v1453, %v1967
        %v2224 = vadd.f32 %v1454, %v1968
        %v2225 = vadd.f32 %v1455, %v1969
        %v2226 = vadd.f32 %v1456, %v1970
        %v2227 = vadd.f32 %v1457, %v1971
        %v2228 = vadd.f32 %v1458, %v1972
        %v2229 = vadd.f32 %v1459, %v1973
        %v2230 = vadd.f32 %v1460, %v1974
        %v2231 = vadd.f32 %v1461, %v1975
        %v2232 = vadd.f32 %v1462, %v1976
        %v2233 = vadd.f32 %v1463, %v1977
        %v2234 = vadd.f32 %v1464, %v1978
        %v2235 = vadd.f32 %v1465, %v1979
        %v2236 = vadd.f32 %v1466, %v1980
        %v2237 = vadd.f32 %v1467, %v1981
        %v2238 = vadd.f32 %v1468, %v1982
        %v2239 = vadd.f32 %v1469, %v1983
        %v2240 = vadd.f32 %v1470, %v1984
        %v2241 = vadd.f32 %v1471, %v1985
        %v2242 = vadd.f32 %v1472, %v1986
        %v2243 = vadd.f32 %v1473, %v1987
        %v2244 = vadd.f32 %v1474, %v1988
        %v2245 = vadd.f32 %v1475, %v1989
        %v2246 = vadd.f32 %v1476, %v1990
        %v2247 = vadd.f32 %v1477, %v1991
        %v2248 = vadd.f32 %v1478, %v1992
        %v2249 = vadd.f32 %v1479, %v1993
        %v2250 = vadd.f32 %v1480, %v1994
        %v2251 = vadd.f32 %v1481, %v1995
        %v2252 = vadd.f32 %v1482, %v1996
        %v2253 = vadd.f32 %v1483, %v1997
        %v2254 = vadd.f32 %v1484, %v1998
        %v2255 = vadd.f32 %v1485, %v1999
        %v2256 = vadd.f32 %v1486, %v2000
        %v2257 = vadd.f32 %v1487, %v2001
        %v2258 = vadd.f32 %v1488, %v2002
        %v2259 = vadd.f32 %v1489, %v2003
        %v2260 = vadd.f32 %v1490, %v2004
        %v2261 = vadd.f32 %v1491, %v2005
        %v2262 = vadd.f32 %v1492, %v2006
        %v2263 = vadd.f32 %v1493, %v2007
        %v2264 = vadd.f32 %v1494, %v2008
        %v2265 = vadd.f32 %v1495, %v2009
        %v2266 = vadd.f32 %v1496, %v2010
        %v2267 = vadd.f32 %v1497, %v2011
        %v2268 = vadd.f32 %v1498, %v2012
        %v2269 = vadd.f32 %v1499, %v2013
        %v2270 = vadd.f32 %v1500, %v2014
        %v2271 = vadd.f32 %v1501, %v2015
        %v2272 = vadd.f32 %v1502, %v2016
        %v2273 = vadd.f32 %v1503, %v2017
        %v2274 = vadd.f32 %v1504, %v2018
        %v2275 = vadd.f32 %v1505, %v2019
        %v2276 = vadd.f32 %v1506, %v2020
        %v2277 = vadd.f32 %v1507, %v2021
        %v2278 = vadd.f32 %v1508, %v2022
        %v2279 = vadd.f32 %v1509, %v2023
        %v2280 = vadd.f32 %v1510, %v2024
        %v2281 = vadd.f32 %v1511, %v2025
        %v2282 = vadd.f32 %v1512, %v2026
        %v2283 = vadd.f32 %v1513, %v2027
        %v2284 = vadd.f32 %v1514, %v2028
        %v2285 = vadd.f32 %v1515, %v2029
        %v2286 = vadd.f32 %v1516, %v2030
        %v2287 = vadd.f32 %v1517, %v2031
        %v2288 = vadd.f32 %v1518, %v2032
        %v2289 = vadd.f32 %v1519, %v2033
        %v2290 = vadd.f32 %v1520, %v2034
        %v2291 = vadd.f32 %v1521, %v2035
        %v2292 = vadd.f32 %v1522, %v2036
        %v2293 = vadd.f32 %v1523, %v2037
        %v2294 = vadd.f32 %v1524, %v2038
        %v2295 = vadd.f32 %v1525, %v2039
        %v2296 = vadd.f32 %v1526, %v2040
        %v2297 = vadd.f32 %v1527, %v2041
        %v2298 = vadd.f32 %v1528, %v2042
        %v2299 = vadd.f32 %v1529, %v2043
        %v2300 = vadd.f32 %v1530, %v2044
        %v2301 = vadd.f32 %v1531, %v2045
        %v2302 = vadd.f32 %v1532, %v2046
        %v2303 = vadd.f32 %v1533, %v2047
        %v2304 = vadd.f32 %v1534, %v2048
        %v2305 = vadd.f32 %v1535, %v2049
        %v2306 = vadd.f32 %v1536, %v2050
        %v2307 = vadd.f32 %v1537, %v2051
        %v2308 = vadd.f32 %v1538, %v2052
        %v2309 = vadd.f32 %v1539, %v2053
        %v2310 = vadd.f32 %v1540, %v2054
        %v2311 = vadd.f32 %v1541, %v2055
        %v2312 = vadd.f32 %v1542, %v2056
        %v2313 = vadd.f32 %v1543, %v2057
        %v2314 = vadd.f32 %v1544, %v2058
        %v2315 = vadd.f32 %v1545, %v2059
        %v2316 = vadd.f32 %v1546, %v2060
        %v2317 = vadd.f32 %v1547, %v2061
        %v2318 = vadd.f32 %v1548, %v2062
        %v2319 = vadd.f32 %v1549, %v2063
        %v2320 = vadd.f32 %v1550, %v2064
        %v2321 = vadd.f32 %v1551, %v2065
        %v2322 = vadd.f32 %v1552, %v2066
        %v2323 = vadd.f32 %v1553, %v2067
        %v2324 = vadd.f32 %v1554, %v2068
        %v2325 = vadd.f32 %v1555, %v2069
        %v2326 = vadd.f32 %v1556, %v2070
        %v2327 = vadd.f32 %v1557, %v2071
        %v2328 = vadd.f32 %v1558, %v2072
        %v2329 = vadd.f32 %v1559, %v2073
        %v2330 = vadd.f32 %v1560, %v2074
        %v2331 = vadd.f32 %v1561, %v2075
        %v2332 = vadd.f32 %v1562, %v2076
        %v2333 = vadd.f32 %v1563, %v2077
        %v2334 = vadd.f32 %v1564, %v2078
        %v2335 = vadd.f32 %v1565, %v2079
        %v2336 = vadd.f32 %v1566, %v2080
        %v2337 = vadd.f32 %v1567, %v2081
        %v2338 = vadd.f32 %v1568, %v2082
        %v2339 = vadd.f32 %v1569, %v2083
        %v2340 = vadd.f32 %v1570, %v2084
        %v2341 = vadd.f32 %v1571, %v2085
        %v2342 = vadd.f32 %v1572, %v2086
        %v2343 = vadd.f32 %v1573, %v2087
        %v2344 = vadd.f32 %v1574, %v2088
        %v2345 = vadd.f32 %v1575, %v2089
        %v2346 = vadd.f32 %v1576, %v2090
        %v2347 = vadd.f32 %v1577, %v2091
        %v2348 = vadd.f32 %v1578, %v2092
        %v2349 = vadd.f32 %v1579, %v2093
        %v2350 = vadd.f32 %v1580, %v2094
        %v2351 = vadd.f32 %v1581, %v2095
        %v2352 = vadd.f32 %v1582, %v2096
        %v2353 = vadd.f32 %v1583, %v2097
        %v2354 = vadd.f32 %v1584, %v2098
        %v2355 = vadd.f32 %v1585, %v2099
        %v2356 = vadd.f32 %v1586, %v2100
        %v2357 = vadd.f32 %v1587, %v2101
        %v2358 = vadd.f32 %v1588, %v2102
        %v2359 = vadd.f32 %v1589, %v2103
        %v2360 = vadd.f32 %v1590, %v2104
        %v2361 = vadd.f32 %v1591, %v2105
        %v2362 = vadd.f32 %v1592, %v2106
        %v2363 = vadd.f32 %v1593, %v2107
        %v2364 = vadd.f32 %v1594, %v2108
        %v2365 = vadd.f32 %v1595, %v2109
        %2366 = vst [vmem:[%s307] sm:$0xff] %v2110
        %2367 = vst [vmem:[%s307 + $0x8] sm:$0xff] %v2111
        %2368 = vst [vmem:[%s307 + $0x10] sm:$0xff] %v2112
        %2369 = vst [vmem:[%s307 + $0x18] sm:$0xff] %v2113
        %2370 = vst [vmem:[%s307 + $0x20] sm:$0xff] %v2114
        %2371 = vst [vmem:[%s307 + $0x28] sm:$0xff] %v2115
        %2372 = vst [vmem:[%s307 + $0x30] sm:$0xff] %v2116
        %2373 = vst [vmem:[%s307 + $0x38] sm:$0xff] %v2117
        %2374 = vst [vmem:[%s307 + $0x40] sm:$0xff] %v2118
        %2375 = vst [vmem:[%s307 + $0x48] sm:$0xff] %v2119
        %2376 = vst [vmem:[%s307 + $0x50] sm:$0xff] %v2120
        %2377 = vst [vmem:[%s307 + $0x58] sm:$0xff] %v2121
        %2378 = vst [vmem:[%s307 + $0x60] sm:$0xff] %v2122
        %2379 = vst [vmem:[%s307 + $0x68] sm:$0xff] %v2123
        %2380 = vst [vmem:[%s307 + $0x70] sm:$0xff] %v2124
        %2381 = vst [vmem:[%s307 + $0x78] sm:$0xff] %v2125
        %2382 = vst [vmem:[%s307 + $0x80] sm:$0xff] %v2126
        %2383 = vst [vmem:[%s307 + $0x88] sm:$0xff] %v2127
        %2384 = vst [vmem:[%s307 + $0x90] sm:$0xff] %v2128
        %2385 = vst [vmem:[%s307 + $0x98] sm:$0xff] %v2129
        %2386 = vst [vmem:[%s307 + $0xa0] sm:$0xff] %v2130
        %2387 = vst [vmem:[%s307 + $0xa8] sm:$0xff] %v2131
        %2388 = vst [vmem:[%s307 + $0xb0] sm:$0xff] %v2132
        %2389 = vst [vmem:[%s307 + $0xb8] sm:$0xff] %v2133
        %2390 = vst [vmem:[%s307 + $0xc0] sm:$0xff] %v2134
        %2391 = vst [vmem:[%s307 + $0xc8] sm:$0xff] %v2135
        %2392 = vst [vmem:[%s307 + $0xd0] sm:$0xff] %v2136
        %2393 = vst [vmem:[%s307 + $0xd8] sm:$0xff] %v2137
        %2394 = vst [vmem:[%s307 + $0xe0] sm:$0xff] %v2138
        %2395 = vst [vmem:[%s307 + $0xe8] sm:$0xff] %v2139
        %2396 = vst [vmem:[%s307 + $0xf0] sm:$0xff] %v2140
        %2397 = vst [vmem:[%s307 + $0xf8] sm:$0xff] %v2141
        %2398 = vst [vmem:[%s307 + $0x100] sm:$0xff] %v2142
        %2399 = vst [vmem:[%s307 + $0x108] sm:$0xff] %v2143
        %2400 = vst [vmem:[%s307 + $0x110] sm:$0xff] %v2144
        %2401 = vst [vmem:[%s307 + $0x118] sm:$0xff] %v2145
        %2402 = vst [vmem:[%s307 + $0x120] sm:$0xff] %v2146
        %2403 = vst [vmem:[%s307 + $0x128] sm:$0xff] %v2147
        %2404 = vst [vmem:[%s307 + $0x130] sm:$0xff] %v2148
        %2405 = vst [vmem:[%s307 + $0x138] sm:$0xff] %v2149
        %2406 = vst [vmem:[%s307 + $0x140] sm:$0xff] %v2150
        %2407 = vst [vmem:[%s307 + $0x148] sm:$0xff] %v2151
        %2408 = vst [vmem:[%s307 + $0x150] sm:$0xff] %v2152
        %2409 = vst [vmem:[%s307 + $0x158] sm:$0xff] %v2153
        %2410 = vst [vmem:[%s307 + $0x160] sm:$0xff] %v2154
        %2411 = vst [vmem:[%s307 + $0x168] sm:$0xff] %v2155
        %2412 = vst [vmem:[%s307 + $0x170] sm:$0xff] %v2156
        %2413 = vst [vmem:[%s307 + $0x178] sm:$0xff] %v2157
        %2414 = vst [vmem:[%s307 + $0x180] sm:$0xff] %v2158
        %2415 = vst [vmem:[%s307 + $0x188] sm:$0xff] %v2159
        %2416 = vst [vmem:[%s307 + $0x190] sm:$0xff] %v2160
        %2417 = vst [vmem:[%s307 + $0x198] sm:$0xff] %v2161
        %2418 = vst [vmem:[%s307 + $0x1a0] sm:$0xff] %v2162
        %2419 = vst [vmem:[%s307 + $0x1a8] sm:$0xff] %v2163
        %2420 = vst [vmem:[%s307 + $0x1b0] sm:$0xff] %v2164
        %2421 = vst [vmem:[%s307 + $0x1b8] sm:$0xff] %v2165
        %2422 = vst [vmem:[%s307 + $0x1c0] sm:$0xff] %v2166
        %2423 = vst [vmem:[%s307 + $0x1c8] sm:$0xff] %v2167
        %2424 = vst [vmem:[%s307 + $0x1d0] sm:$0xff] %v2168
        %2425 = vst [vmem:[%s307 + $0x1d8] sm:$0xff] %v2169
        %2426 = vst [vmem:[%s307 + $0x1e0] sm:$0xff] %v2170
        %2427 = vst [vmem:[%s307 + $0x1e8] sm:$0xff] %v2171
        %2428 = vst [vmem:[%s307 + $0x1f0] sm:$0xff] %v2172
        %2429 = vst [vmem:[%s307 + $0x1f8] sm:$0xff] %v2173
        %2430 = vst [vmem:[%s307 + $0x200] sm:$0xff] %v2174
        %2431 = vst [vmem:[%s307 + $0x208] sm:$0xff] %v2175
        %2432 = vst [vmem:[%s307 + $0x210] sm:$0xff] %v2176
        %2433 = vst [vmem:[%s307 + $0x218] sm:$0xff] %v2177
        %2434 = vst [vmem:[%s307 + $0x220] sm:$0xff] %v2178
        %2435 = vst [vmem:[%s307 + $0x228] sm:$0xff] %v2179
        %2436 = vst [vmem:[%s307 + $0x230] sm:$0xff] %v2180
        %2437 = vst [vmem:[%s307 + $0x238] sm:$0xff] %v2181
        %2438 = vst [vmem:[%s307 + $0x240] sm:$0xff] %v2182
        %2439 = vst [vmem:[%s307 + $0x248] sm:$0xff] %v2183
        %2440 = vst [vmem:[%s307 + $0x250] sm:$0xff] %v2184
        %2441 = vst [vmem:[%s307 + $0x258] sm:$0xff] %v2185
        %2442 = vst [vmem:[%s307 + $0x260] sm:$0xff] %v2186
        %2443 = vst [vmem:[%s307 + $0x268] sm:$0xff] %v2187
        %2444 = vst [vmem:[%s307 + $0x270] sm:$0xff] %v2188
        %2445 = vst [vmem:[%s307 + $0x278] sm:$0xff] %v2189
        %2446 = vst [vmem:[%s307 + $0x280] sm:$0xff] %v2190
        %2447 = vst [vmem:[%s307 + $0x288] sm:$0xff] %v2191
        %2448 = vst [vmem:[%s307 + $0x290] sm:$0xff] %v2192
        %2449 = vst [vmem:[%s307 + $0x298] sm:$0xff] %v2193
        %2450 = vst [vmem:[%s307 + $0x2a0] sm:$0xff] %v2194
        %2451 = vst [vmem:[%s307 + $0x2a8] sm:$0xff] %v2195
        %2452 = vst [vmem:[%s307 + $0x2b0] sm:$0xff] %v2196
        %2453 = vst [vmem:[%s307 + $0x2b8] sm:$0xff] %v2197
        %2454 = vst [vmem:[%s307 + $0x2c0] sm:$0xff] %v2198
        %2455 = vst [vmem:[%s307 + $0x2c8] sm:$0xff] %v2199
        %2456 = vst [vmem:[%s307 + $0x2d0] sm:$0xff] %v2200
        %2457 = vst [vmem:[%s307 + $0x2d8] sm:$0xff] %v2201
        %2458 = vst [vmem:[%s307 + $0x2e0] sm:$0xff] %v2202
        %2459 = vst [vmem:[%s307 + $0x2e8] sm:$0xff] %v2203
        %2460 = vst [vmem:[%s307 + $0x2f0] sm:$0xff] %v2204
        %2461 = vst [vmem:[%s307 + $0x2f8] sm:$0xff] %v2205
        %2462 = vst [vmem:[%s307 + $0x300] sm:$0xff] %v2206
        %2463 = vst [vmem:[%s307 + $0x308] sm:$0xff] %v2207
        %2464 = vst [vmem:[%s307 + $0x310] sm:$0xff] %v2208
        %2465 = vst [vmem:[%s307 + $0x318] sm:$0xff] %v2209
        %2466 = vst [vmem:[%s307 + $0x320] sm:$0xff] %v2210
        %2467 = vst [vmem:[%s307 + $0x328] sm:$0xff] %v2211
        %2468 = vst [vmem:[%s307 + $0x330] sm:$0xff] %v2212
        %2469 = vst [vmem:[%s307 + $0x338] sm:$0xff] %v2213
        %2470 = vst [vmem:[%s307 + $0x340] sm:$0xff] %v2214
        %2471 = vst [vmem:[%s307 + $0x348] sm:$0xff] %v2215
        %2472 = vst [vmem:[%s307 + $0x350] sm:$0xff] %v2216
        %2473 = vst [vmem:[%s307 + $0x358] sm:$0xff] %v2217
        %2474 = vst [vmem:[%s307 + $0x360] sm:$0xff] %v2218
        %2475 = vst [vmem:[%s307 + $0x368] sm:$0xff] %v2219
        %2476 = vst [vmem:[%s307 + $0x370] sm:$0xff] %v2220
        %2477 = vst [vmem:[%s307 + $0x378] sm:$0xff] %v2221
        %2478 = vst [vmem:[%s307 + $0x380] sm:$0xff] %v2222
        %2479 = vst [vmem:[%s307 + $0x388] sm:$0xff] %v2223
        %2480 = vst [vmem:[%s307 + $0x390] sm:$0xff] %v2224
        %2481 = vst [vmem:[%s307 + $0x398] sm:$0xff] %v2225
        %2482 = vst [vmem:[%s307 + $0x3a0] sm:$0xff] %v2226
        %2483 = vst [vmem:[%s307 + $0x3a8] sm:$0xff] %v2227
        %2484 = vst [vmem:[%s307 + $0x3b0] sm:$0xff] %v2228
        %2485 = vst [vmem:[%s307 + $0x3b8] sm:$0xff] %v2229
        %2486 = vst [vmem:[%s307 + $0x3c0] sm:$0xff] %v2230
        %2487 = vst [vmem:[%s307 + $0x3c8] sm:$0xff] %v2231
        %2488 = vst [vmem:[%s307 + $0x3d0] sm:$0xff] %v2232
        %2489 = vst [vmem:[%s307 + $0x3d8] sm:$0xff] %v2233
        %2490 = vst [vmem:[%s307 + $0x3e0] sm:$0xff] %v2234
        %2491 = vst [vmem:[%s307 + $0x3e8] sm:$0xff] %v2235
        %2492 = vst [vmem:[%s307 + $0x3f0] sm:$0xff] %v2236
        %2493 = vst [vmem:[%s307 + $0x3f8] sm:$0xff] %v2237
        %2494 = vst [vmem:[%s307 + $0x400] sm:$0xff] %v2238
        %2495 = vst [vmem:[%s307 + $0x408] sm:$0xff] %v2239
        %2496 = vst [vmem:[%s307 + $0x410] sm:$0xff] %v2240
        %2497 = vst [vmem:[%s307 + $0x418] sm:$0xff] %v2241
        %2498 = vst [vmem:[%s307 + $0x420] sm:$0xff] %v2242
        %2499 = vst [vmem:[%s307 + $0x428] sm:$0xff] %v2243
        %2500 = vst [vmem:[%s307 + $0x430] sm:$0xff] %v2244
        %2501 = vst [vmem:[%s307 + $0x438] sm:$0xff] %v2245
        %2502 = vst [vmem:[%s307 + $0x440] sm:$0xff] %v2246
        %2503 = vst [vmem:[%s307 + $0x448] sm:$0xff] %v2247
        %2504 = vst [vmem:[%s307 + $0x450] sm:$0xff] %v2248
        %2505 = vst [vmem:[%s307 + $0x458] sm:$0xff] %v2249
        %2506 = vst [vmem:[%s307 + $0x460] sm:$0xff] %v2250
        %2507 = vst [vmem:[%s307 + $0x468] sm:$0xff] %v2251
        %2508 = vst [vmem:[%s307 + $0x470] sm:$0xff] %v2252
        %2509 = vst [vmem:[%s307 + $0x478] sm:$0xff] %v2253
        %2510 = vst [vmem:[%s307 + $0x480] sm:$0xff] %v2254
        %2511 = vst [vmem:[%s307 + $0x488] sm:$0xff] %v2255
        %2512 = vst [vmem:[%s307 + $0x490] sm:$0xff] %v2256
        %2513 = vst [vmem:[%s307 + $0x498] sm:$0xff] %v2257
        %2514 = vst [vmem:[%s307 + $0x4a0] sm:$0xff] %v2258
        %2515 = vst [vmem:[%s307 + $0x4a8] sm:$0xff] %v2259
        %2516 = vst [vmem:[%s307 + $0x4b0] sm:$0xff] %v2260
        %2517 = vst [vmem:[%s307 + $0x4b8] sm:$0xff] %v2261
        %2518 = vst [vmem:[%s307 + $0x4c0] sm:$0xff] %v2262
        %2519 = vst [vmem:[%s307 + $0x4c8] sm:$0xff] %v2263
        %2520 = vst [vmem:[%s307 + $0x4d0] sm:$0xff] %v2264
        %2521 = vst [vmem:[%s307 + $0x4d8] sm:$0xff] %v2265
        %2522 = vst [vmem:[%s307 + $0x4e0] sm:$0xff] %v2266
        %2523 = vst [vmem:[%s307 + $0x4e8] sm:$0xff] %v2267
        %2524 = vst [vmem:[%s307 + $0x4f0] sm:$0xff] %v2268
        %2525 = vst [vmem:[%s307 + $0x4f8] sm:$0xff] %v2269
        %2526 = vst [vmem:[%s307 + $0x500] sm:$0xff] %v2270
        %2527 = vst [vmem:[%s307 + $0x508] sm:$0xff] %v2271
        %2528 = vst [vmem:[%s307 + $0x510] sm:$0xff] %v2272
        %2529 = vst [vmem:[%s307 + $0x518] sm:$0xff] %v2273
        %2530 = vst [vmem:[%s307 + $0x520] sm:$0xff] %v2274
        %2531 = vst [vmem:[%s307 + $0x528] sm:$0xff] %v2275
        %2532 = vst [vmem:[%s307 + $0x530] sm:$0xff] %v2276
        %2533 = vst [vmem:[%s307 + $0x538] sm:$0xff] %v2277
        %2534 = vst [vmem:[%s307 + $0x540] sm:$0xff] %v2278
        %2535 = vst [vmem:[%s307 + $0x548] sm:$0xff] %v2279
        %2536 = vst [vmem:[%s307 + $0x550] sm:$0xff] %v2280
        %2537 = vst [vmem:[%s307 + $0x558] sm:$0xff] %v2281
        %2538 = vst [vmem:[%s307 + $0x560] sm:$0xff] %v2282
        %2539 = vst [vmem:[%s307 + $0x568] sm:$0xff] %v2283
        %2540 = vst [vmem:[%s307 + $0x570] sm:$0xff] %v2284
        %2541 = vst [vmem:[%s307 + $0x578] sm:$0xff] %v2285
        %2542 = vst [vmem:[%s307 + $0x580] sm:$0xff] %v2286
        %2543 = vst [vmem:[%s307 + $0x588] sm:$0xff] %v2287
        %2544 = vst [vmem:[%s307 + $0x590] sm:$0xff] %v2288
        %2545 = vst [vmem:[%s307 + $0x598] sm:$0xff] %v2289
        %2546 = vst [vmem:[%s307 + $0x5a0] sm:$0xff] %v2290
        %2547 = vst [vmem:[%s307 + $0x5a8] sm:$0xff] %v2291
        %2548 = vst [vmem:[%s307 + $0x5b0] sm:$0xff] %v2292
        %2549 = vst [vmem:[%s307 + $0x5b8] sm:$0xff] %v2293
        %2550 = vst [vmem:[%s307 + $0x5c0] sm:$0xff] %v2294
        %2551 = vst [vmem:[%s307 + $0x5c8] sm:$0xff] %v2295
        %2552 = vst [vmem:[%s307 + $0x5d0] sm:$0xff] %v2296
        %2553 = vst [vmem:[%s307 + $0x5d8] sm:$0xff] %v2297
        %2554 = vst [vmem:[%s307 + $0x5e0] sm:$0xff] %v2298
        %2555 = vst [vmem:[%s307 + $0x5e8] sm:$0xff] %v2299
        %2556 = vst [vmem:[%s307 + $0x5f0] sm:$0xff] %v2300
        %2557 = vst [vmem:[%s307 + $0x5f8] sm:$0xff] %v2301
        %2558 = vst [vmem:[%s307 + $0x600] sm:$0xff] %v2302
        %2559 = vst [vmem:[%s307 + $0x608] sm:$0xff] %v2303
        %2560 = vst [vmem:[%s307 + $0x610] sm:$0xff] %v2304
        %2561 = vst [vmem:[%s307 + $0x618] sm:$0xff] %v2305
        %2562 = vst [vmem:[%s307 + $0x620] sm:$0xff] %v2306
        %2563 = vst [vmem:[%s307 + $0x628] sm:$0xff] %v2307
        %2564 = vst [vmem:[%s307 + $0x630] sm:$0xff] %v2308
        %2565 = vst [vmem:[%s307 + $0x638] sm:$0xff] %v2309
        %2566 = vst [vmem:[%s307 + $0x640] sm:$0xff] %v2310
        %2567 = vst [vmem:[%s307 + $0x648] sm:$0xff] %v2311
        %2568 = vst [vmem:[%s307 + $0x650] sm:$0xff] %v2312
        %2569 = vst [vmem:[%s307 + $0x658] sm:$0xff] %v2313
        %2570 = vst [vmem:[%s307 + $0x660] sm:$0xff] %v2314
        %2571 = vst [vmem:[%s307 + $0x668] sm:$0xff] %v2315
        %2572 = vst [vmem:[%s307 + $0x670] sm:$0xff] %v2316
        %2573 = vst [vmem:[%s307 + $0x678] sm:$0xff] %v2317
        %2574 = vst [vmem:[%s307 + $0x680] sm:$0xff] %v2318
        %2575 = vst [vmem:[%s307 + $0x688] sm:$0xff] %v2319
        %2576 = vst [vmem:[%s307 + $0x690] sm:$0xff] %v2320
        %2577 = vst [vmem:[%s307 + $0x698] sm:$0xff] %v2321
        %2578 = vst [vmem:[%s307 + $0x6a0] sm:$0xff] %v2322
        %2579 = vst [vmem:[%s307 + $0x6a8] sm:$0xff] %v2323
        %2580 = vst [vmem:[%s307 + $0x6b0] sm:$0xff] %v2324
        %2581 = vst [vmem:[%s307 + $0x6b8] sm:$0xff] %v2325
        %2582 = vst [vmem:[%s307 + $0x6c0] sm:$0xff] %v2326
        %2583 = vst [vmem:[%s307 + $0x6c8] sm:$0xff] %v2327
        %2584 = vst [vmem:[%s307 + $0x6d0] sm:$0xff] %v2328
        %2585 = vst [vmem:[%s307 + $0x6d8] sm:$0xff] %v2329
        %2586 = vst [vmem:[%s307 + $0x6e0] sm:$0xff] %v2330
        %2587 = vst [vmem:[%s307 + $0x6e8] sm:$0xff] %v2331
        %2588 = vst [vmem:[%s307 + $0x6f0] sm:$0xff] %v2332
        %2589 = vst [vmem:[%s307 + $0x6f8] sm:$0xff] %v2333
        %2590 = vst [vmem:[%s307 + $0x700] sm:$0xff] %v2334
        %2591 = vst [vmem:[%s307 + $0x708] sm:$0xff] %v2335
        %2592 = vst [vmem:[%s307 + $0x710] sm:$0xff] %v2336
        %2593 = vst [vmem:[%s307 + $0x718] sm:$0xff] %v2337
        %2594 = vst [vmem:[%s307 + $0x720] sm:$0xff] %v2338
        %2595 = vst [vmem:[%s307 + $0x728] sm:$0xff] %v2339
        %2596 = vst [vmem:[%s307 + $0x730] sm:$0xff] %v2340
        %2597 = vst [vmem:[%s307 + $0x738] sm:$0xff] %v2341
        %2598 = vst [vmem:[%s307 + $0x740] sm:$0xff] %v2342
        %2599 = vst [vmem:[%s307 + $0x748] sm:$0xff] %v2343
        %2600 = vst [vmem:[%s307 + $0x750] sm:$0xff] %v2344
        %2601 = vst [vmem:[%s307 + $0x758] sm:$0xff] %v2345
        %2602 = vst [vmem:[%s307 + $0x760] sm:$0xff] %v2346
        %2603 = vst [vmem:[%s307 + $0x768] sm:$0xff] %v2347
        %2604 = vst [vmem:[%s307 + $0x770] sm:$0xff] %v2348
        %2605 = vst [vmem:[%s307 + $0x778] sm:$0xff] %v2349
        %2606 = vst [vmem:[%s307 + $0x780] sm:$0xff] %v2350
        %2607 = vst [vmem:[%s307 + $0x788] sm:$0xff] %v2351
        %2608 = vst [vmem:[%s307 + $0x790] sm:$0xff] %v2352
        %2609 = vst [vmem:[%s307 + $0x798] sm:$0xff] %v2353
        %2610 = vst [vmem:[%s307 + $0x7a0] sm:$0xff] %v2354
        %2611 = vst [vmem:[%s307 + $0x7a8] sm:$0xff] %v2355
        %2612 = vst [vmem:[%s307 + $0x7b0] sm:$0xff] %v2356
        %2613 = vst [vmem:[%s307 + $0x7b8] sm:$0xff] %v2357
        %2614 = vst [vmem:[%s307 + $0x7c0] sm:$0xff] %v2358
        %2615 = vst [vmem:[%s307 + $0x7c8] sm:$0xff] %v2359
        %2616 = vst [vmem:[%s307 + $0x7d0] sm:$0xff] %v2360
        %2617 = vst [vmem:[%s307 + $0x7d8] sm:$0xff] %v2361
        %2618 = vst [vmem:[%s307 + $0x7e0] sm:$0xff] %v2362
        %2619 = vst [vmem:[%s307 + $0x7e8] sm:$0xff] %v2363
        %2620 = vst [vmem:[%s307 + $0x7f0] sm:$0xff] %v2364
        %2621 = vst [vmem:[%s307 + $0x7f8] sm:$0xff] %v2365
        %s2622 = sand.u32 %s132, 1
        %s2623 = scalar_lea.sflag [#allocation4], %s2622
        %s2624 = sand.u32 %s132, 1
        %s2625 = smul.addr %s2624, 2048
        %s2626 = scalar_lea.vmem [#allocation10], %s2625
        // Predicated region
        $region53: #{tpu_custom_call.1} parent=35 // pred_check
          %p2627 = pneg %p142
        $region54: #{tpu_custom_call.1} parent=35 // pred_check_branch
          %2629 = sbr.rel (%p2627) target = $region56
        $region55: #{tpu_custom_call.1} parent=35 // pred_region
          %s2630 = smul.u32 64, %s25
          %s2632 = ssub.s32 32768, 32768
          %2633 = vsyncadd %s2623, %s2632
          %s2634 = smul.addr %s2630, 4
          %s2635 = smul.addr %s2634, 128
          %s2636 = scalar_lea.hbm %s4, %s2635
          %s2637 = sshll.u32 %s2626, 4
          %s2638 = int_to_ptr.vmem [resolvable:$true] %s2637
          %2643 = dma.vmem_to_hbm [thread:$0]  %s2638, 32768, %s2636, %s2623, 512, 512, 32
        $region56: #{tpu_custom_call.1} parent=35 // pred_fallthru
          _
      $region36: #{tpu_custom_call.1} parent=5 // pred_fallthru
        _
      %p2644 = scmp.le.s32.totalorder 2, %s20
      // Predicated region
      $region57: #{tpu_custom_call.1} parent=5 // pred_check
        %p2645 = pneg %p2644
      $region58: #{tpu_custom_call.1} parent=5 // pred_check_branch
        %2647 = sbr.rel (%p2645) target = $region60
      $region59: #{tpu_custom_call.1} parent=5 // pred_region
        %s2648 = ssub.s32 %s20, 2
        // Predicated region
        $region61: #{tpu_custom_call.1} parent=59 // pred_check
          %p2649 = pneg %p148
        $region62: #{tpu_custom_call.1} parent=59 // pred_check_branch
          %2651 = sbr.rel (%p2649) target = $region64
        $region63: #{tpu_custom_call.1} parent=59 // pred_region
          %s2652 = sand.u32 %s133, 1
          %s2653 = scalar_lea.sflag [#allocation4], %s2652
          %s2654 = sand.u32 %s133, 1
          %s2655 = smul.addr %s2654, 2048
          %s2656 = scalar_lea.vmem [#allocation10], %s2655
          %2657 = dma.done %s2653, 32768
        $region64: #{tpu_custom_call.1} parent=59 // pred_fallthru
          _
      $region60: #{tpu_custom_call.1} parent=5 // pred_fallthru
        _
    $region6: #{tpu_custom_call.1} parent=1 // loop_footer
      %s24 = sadd.s32 1, %s20
    $region7: #{tpu_custom_call.1} parent=1 // loop_footer_branch
      %19 = sbr.rel target = $region3
    $region8: #{tpu_custom_call.1} parent=1 // loop_exit
      _
    %2658 = vsyncpa [#allocation3], 1
    %s2659 = scalar_lea.sflag [#allocation3], 1
    %2660 = vsyncpa %s2659, 1
    %2661 = vsyncpa [#allocation8], 1
    %s2662 = scalar_lea.sflag [#allocation8], 1
    %2663 = vsyncpa %s2662, 1
    %2664 = vsyncpa [#allocation4], 1
    %s2665 = scalar_lea.sflag [#allocation4], 1
    %2666 = vsyncpa %s2665, 1
    %2667 = vsyncpa [#allocation5], 1
    %s2668 = scalar_lea.sflag [#allocation5], 1
    %2669 = vsyncpa %s2668, 1

</llo_original>
